<compile_context>
chip_gen: v7x
topology: tpu7x:2x2x1
jax: 0.10.0
libtpu: 0.0.40
codegen_flags: <defaults>
</compile_context>

<pallas_src>
import functools

import jax
import jax.numpy as jnp
from jax import lax
from jax.experimental import pallas as pl
from jax.experimental.pallas import tpu as pltpu


def _round_up(x, m):
    return (x + m - 1) // m * m


# -----------------------------------------------------------------------------
# Fused latent-path kernel: tree rsample + mol rsample + KL + assm scoring.
# Grid: one axis over candidate tiles.
# -----------------------------------------------------------------------------
def _latent_kernel(x_tree_ref, x_mol_ref, wt_ref, bt_ref, wg_ref, bg_ref,
                   aw_ref, eps_t_ref, eps_m_ref, cand_ref, bidx_ref,
                   z_tree_ref, z_mol_ref, scores_ref, kl_ref, za_ref):
    Lp = z_tree_ref.shape[1]
    B = x_tree_ref.shape[0]

    # ---- once, on the first candidate tile: rsample + KL + A_assm(z_mol) ----
    @pl.when(pl.program_id(0) == 0)
    def _():
        inv_b = 1.0 / float(B)
        xt = x_tree_ref[...]                       # (B, Hp) bf16
        xm = x_mol_ref[...]

        # One (Hp, 2*Lp) matmul per branch: cols [0:Lp]=mean, [Lp:2Lp]=var.
        yt = jnp.dot(xt, wt_ref[...], preferred_element_type=jnp.float32) + bt_ref[...]
        ym = jnp.dot(xm, wg_ref[...], preferred_element_type=jnp.float32) + bg_ref[...]

        mt, lvt = yt[:, :Lp], -jnp.abs(yt[:, Lp:])      # whole-vreg slices
        mm, lvm = ym[:, :Lp], -jnp.abs(ym[:, Lp:])

        # Single EUP exp stream per element: exp(lv) = exp(lv/2)^2.
        st = jnp.exp(0.5 * lvt)
        sm = jnp.exp(0.5 * lvm)

        # Padded columns contribute exactly 0 (m=0, lv=0, exp(lv)=1).
        kl = -0.5 * (jnp.sum(1.0 + lvt - mt * mt - st * st)
                     + jnp.sum(1.0 + lvm - mm * mm - sm * sm)) * inv_b
        kl_ref[0, 0] = kl                               # scalar -> SMEM

        z_tree = mt + st * eps_t_ref[...]
        z_mol = mm + sm * eps_m_ref[...]
        z_tree_ref[...] = z_tree
        z_mol_ref[...] = z_mol

        # A_assm on the B distinct molecules ONCE; kept resident (bf16) in
        # scratch and reused by every candidate tile.
        za = jnp.dot(z_mol.astype(aw_ref.dtype), aw_ref[...],
                     preferred_element_type=jnp.float32)
        za_ref[...] = za.astype(za_ref.dtype)

    # ---- every tile: scores for this slice of candidates --------------------
    cand = cand_ref[...]                                # (tile_c, Hp) bf16
    # Contract over H in-kernel (no wrapper-side cand_vecs.T round-trip).
    sc = lax.dot_general(za_ref[...], cand,
                         dimension_numbers=(((1,), (1,)), ((), ())),
                         preferred_element_type=jnp.float32)   # (B, tile_c)
    bidx = bidx_ref[...]                                # (1, tile_c) int32
    sel = bidx == lax.broadcasted_iota(jnp.int32, sc.shape, 0)
    scores_ref[...] = jnp.sum(jnp.where(sel, sc, 0.0), axis=0, keepdims=True)


# -----------------------------------------------------------------------------
# One-time parameter preparation (hoisted out of the training step):
# fuse mean|var weights, pad H->Hp and each half to Lp (128-aligned), cast MXU
# operands to bf16. Biases stay f32.
# -----------------------------------------------------------------------------
def prepare_params(params, hidden_size, latent, *, mxu_dtype=jnp.bfloat16):
    Hp = _round_up(hidden_size, 128)
    Lp = _round_up(latent, 128)

    def fuse(wm, wv, bm, bv):
        w = jnp.zeros((Hp, 2 * Lp), jnp.float32)
        w = w.at[:hidden_size, :latent].set(wm)
        w = w.at[:hidden_size, Lp:Lp + latent].set(wv)
        b = jnp.zeros((1, 2 * Lp), jnp.float32)
        b = b.at[0, :latent].set(bm)
        b = b.at[0, Lp:Lp + latent].set(bv)
        return w.astype(mxu_dtype), b

    wt, bt = fuse(params["T_mean_W"], params["T_var_W"],
                  params["T_mean_b"], params["T_var_b"])
    wg, bg = fuse(params["G_mean_W"], params["G_var_W"],
                  params["G_mean_b"], params["G_var_b"])
    aw = (jnp.zeros((Lp, Hp), jnp.float32)
          .at[:latent, :hidden_size].set(params["A_assm_W"]).astype(mxu_dtype))
    return {"wt": wt, "bt": bt, "wg": wg, "bg": bg, "aw": aw}


# -----------------------------------------------------------------------------
# pallas_call wrapper: pads activations, builds the C-tiled grid spec.
# -----------------------------------------------------------------------------
def jtnn_latent_pallas(prep, x_tree_vecs, x_mol_vecs, cand_vecs, batch_idx,
                       eps_tree, eps_mol, *, tile_c=512):
    B = x_tree_vecs.shape[0]
    C = cand_vecs.shape[0]
    L = eps_tree.shape[1]
    Hp = prep["wt"].shape[0]
    Lp = prep["wt"].shape[1] // 2
    mxu_dtype = prep["wt"].dtype
    isz = prep["wt"].dtype.itemsize
    Cp = _round_up(max(C, tile_c), tile_c)

    # NOTE: candidates with batch_idx outside [0, B) are silently scored 0 by
    # the one-hot select; callers must guarantee 0 <= batch_idx < B.
    # TODO(synk): at production scale have JTMPN emit cand_vecs already padded
    #             to (Cp, Hp) to avoid this extra HBM copy.
    def pad2(a, r, c, dtype):
        return jnp.zeros((r, c), dtype).at[:a.shape[0], :a.shape[1]].set(a.astype(dtype))

    xt = pad2(x_tree_vecs, B, Hp, mxu_dtype)
    xm = pad2(x_mol_vecs, B, Hp, mxu_dtype)
    et = pad2(eps_tree, B, Lp, jnp.float32)           # padded cols -> z pad = 0
    em = pad2(eps_mol, B, Lp, jnp.float32)
    cand = pad2(cand_vecs, Cp, Hp, mxu_dtype)
    bidx = jnp.full((1, Cp), -1, jnp.int32).at[0, :C].set(batch_idx.astype(jnp.int32))

    n_tiles = Cp // tile_c
    rz = lambda c: (0, 0)                              # resident blocks

    grid_spec = pltpu.PrefetchScalarGridSpec(
        num_scalar_prefetch=0,
        grid=(n_tiles,),
        in_specs=[
            pl.BlockSpec((B, Hp), rz),                          # x_tree
            pl.BlockSpec((B, Hp), rz),                          # x_mol
            pl.BlockSpec((Hp, 2 * Lp), rz),                     # wt (mean|var)
            pl.BlockSpec((1, 2 * Lp), rz),                      # bt
            pl.BlockSpec((Hp, 2 * Lp), rz),                     # wg
            pl.BlockSpec((1, 2 * Lp), rz),                      # bg
            pl.BlockSpec((Lp, Hp), rz),                         # A_assm
            pl.BlockSpec((B, Lp), rz),                          # eps_tree
            pl.BlockSpec((B, Lp), rz),                          # eps_mol
            pl.BlockSpec((tile_c, Hp), lambda c: (c, 0)),       # cand tile
            pl.BlockSpec((1, tile_c), lambda c: (0, c)),        # batch_idx tile
        ],
        out_specs=(
            pl.BlockSpec((B, Lp), rz),                          # z_tree
            pl.BlockSpec((B, Lp), rz),                          # z_mol
            pl.BlockSpec((1, tile_c), lambda c: (0, c)),        # scores tile
            pl.BlockSpec((1, 1), rz,
                         memory_space=pltpu.MemorySpace.SMEM),  # kl scalar
        ),
        scratch_shapes=[pltpu.VMEM((B, Hp), mxu_dtype)],        # za = A_assm(z_mol)
    )

    flops = (2 * 2 * B * Hp * 2 * Lp      # tree + mol mean|var projections
             + 2 * B * Lp * Hp            # A_assm
             + 2 * B * Hp * Cp)           # candidate scores
    bytes_accessed = (cand.size * isz + bidx.size * 4
                      + (prep["wt"].size + prep["wg"].size + prep["aw"].size) * isz
                      + (xt.size + xm.size) * isz + (et.size + em.size) * 4
                      + (2 * B * Lp + Cp + 1) * 4)
    cost = pl.CostEstimate(flops=flops, transcendentals=2 * B * Lp,
                           bytes_accessed=bytes_accessed)

    resident = ((xt.size + xm.size + prep["aw"].size
                 + prep["wt"].size + prep["wg"].size) * isz
                + (prep["bt"].size + prep["bg"].size) * 4
                + (et.size + em.size) * 4 + 2 * B * Lp * 4 + B * Hp * isz)
    streamed = tile_c * Hp * isz + tile_c * 4 + tile_c * 4
    vmem_limit = int(min(max(resident + 4 * streamed + (2 << 20), 8 << 20), 64 << 20))

    z_tree, z_mol, scores, kl = pl.pallas_call(
        _latent_kernel,
        out_shape=(jax.ShapeDtypeStruct((B, Lp), jnp.float32),
                   jax.ShapeDtypeStruct((B, Lp), jnp.float32),
                   jax.ShapeDtypeStruct((1, Cp), jnp.float32),
                   jax.ShapeDtypeStruct((1, 1), jnp.float32)),
        grid_spec=grid_spec,
        compiler_params=pltpu.CompilerParams(
            # Resident z/kl outputs + persistent za scratch require "arbitrary".
            # TODO(synk): for v7x 2-TC sharding, duplicate the rsample per core
            #             and mark this axis "parallel".
            dimension_semantics=("arbitrary",),
            vmem_limit_bytes=vmem_limit),
        cost_estimate=cost,
    )(xt, xm, prep["wt"], prep["bt"], prep["wg"], prep["bg"], prep["aw"],
      et, em, cand, bidx)

    return z_tree[:, :L], z_mol[:, :L], scores[0, :C], kl[0, 0]


# -----------------------------------------------------------------------------
# Forward wrapper (glue in plain JAX: cross-entropy bookkeeping)
# -----------------------------------------------------------------------------
def jtnnvae_forward(prep, x_tree_vecs, x_mol_vecs, cand_vecs, batch_idx,
                    eps_tree, eps_mol, labels, beta, *, ncand, tile_c):
    z_tree, z_mol, scores, kl_div = jtnn_latent_pallas(
        prep, x_tree_vecs, x_mol_vecs, cand_vecs, batch_idx,
        eps_tree, eps_mol, tile_c=tile_c)

    # TODO(synk): JTNNDecoder word/topo losses (dynamic tree traversal) skipped.
    word_loss = jnp.float32(0.0)
    topo_loss = jnp.float32(0.0)
    word_acc = 1.0
    topo_acc = 1.0

    # per-node cross-entropy over its candidates (fixed ncand per node here).
    # TODO(synk): real JTNNVAE has variable candidate counts per node; that
    #             needs -inf padding + masking rather than a plain reshape.
    B = x_tree_vecs.shape[0]
    seg = scores.reshape(-1, ncand)
    lse = jax.nn.logsumexp(seg, axis=-1)
    picked = jnp.take_along_axis(seg, labels[:, None], axis=-1)[:, 0]
    assm_loss = jnp.sum(lse - picked) / B
    assm_acc = jnp.mean((picked >= jnp.max(seg, axis=-1)).astype(jnp.float32))

    total = word_loss + topo_loss + assm_loss + beta * kl_div
    return (total, kl_div, word_acc, topo_acc, assm_loss, assm_acc,
            z_tree, z_mol, scores)


# -----------------------------------------------------------------------------
# Deterministic parameter init (xavier-normal weights, zero biases, as in
# main_vae_train) and pure-JAX references for sanity checking.
# -----------------------------------------------------------------------------
def init_params(key, hidden_size, latent_size):
    latent = latent_size // 2
    ks = jax.random.split(key, 5)

    def xavier(k, shape):
        fan_in, fan_out = shape
        std = (2.0 / (fan_in + fan_out)) ** 0.5
        return std * jax.random.normal(k, shape, dtype=jnp.float32)

    return {
        # stored as (in, out) = transposed torch layout
        "T_mean_W": xavier(ks[0], (hidden_size, latent)),
        "T_mean_b": jnp.zeros((latent,), jnp.float32),
        "T_var_W": xavier(ks[1], (hidden_size, latent)),
        "T_var_b": jnp.zeros((latent,), jnp.float32),
        "G_mean_W": xavier(ks[2], (hidden_size, latent)),
        "G_mean_b": jnp.zeros((latent,), jnp.float32),
        "G_var_W": xavier(ks[3], (hidden_size, latent)),
        "G_var_b": jnp.zeros((latent,), jnp.float32),
        "A_assm_W": xavier(ks[4], (latent, hidden_size)),  # Linear(latent, hidden, bias=False)
    }


def _latent_ref(params, xt, xm, cand, bidx, et, em, dtype):
    """Pure-JAX reference. dtype=float32 reproduces the torch module exactly;
    dtype=bfloat16 mirrors the kernel's MXU operand casts (f32 accumulate,
    f32 elementwise math)."""
    def rs(x, wm, bm, wv, bv, eps):
        xq = x.astype(dtype)
        m = jnp.dot(xq, wm.astype(dtype), preferred_element_type=jnp.float32) + bm
        lv = -jnp.abs(jnp.dot(xq, wv.astype(dtype),
                              preferred_element_type=jnp.float32) + bv)
        kl = -0.5 * jnp.sum(1.0 + lv - m * m - jnp.exp(lv)) / x.shape[0]
        return m + jnp.exp(lv / 2) * eps, kl

    zt, klt = rs(xt, params["T_mean_W"], params["T_mean_b"],
                 params["T_var_W"], params["T_var_b"], et)
    zm, klm = rs(xm, params["G_mean_W"], params["G_mean_b"],
                 params["G_var_W"], params["G_var_b"], em)
    za = jnp.dot(zm.astype(dtype), params["A_assm_W"].astype(dtype),
                 preferred_element_type=jnp.float32).astype(dtype)
    xg = jnp.take(za, bidx, axis=0).astype(jnp.float32)
    scores = jnp.sum(xg * cand.astype(dtype).astype(jnp.float32), axis=-1)
    return zt, zm, scores, klt + klm


if __name__ == "__main__":
    hidden_size = 32
    latent_size = 16          # module halves it -> latent = 8
    latent = latent_size // 2
    B = 4                     # batch of molecules
    n_nodes = 48              # nodes with >1 candidates
    ncand = 6                 # candidates per node
    C = n_nodes * ncand       # 288 -> Cp = 384 -> 3 candidate tiles of 128
    tile_c = 128

    key = jax.random.PRNGKey(0)
    kp, k1, k2, k3, k4, k5, k6 = jax.random.split(key, 7)

    params = init_params(kp, hidden_size, latent_size)
    prep = prepare_params(params, hidden_size, latent)   # once, outside the step

    x_tree_vecs = jax.random.normal(k1, (B, hidden_size), jnp.float32)
    x_mol_vecs = jax.random.normal(k2, (B, hidden_size), jnp.float32)
    cand_vecs = jax.random.normal(k3, (C, hidden_size), jnp.float32)
    batch_idx = jax.random.randint(k4, (C,), 0, B, jnp.int32)
    eps_tree = jax.random.normal(k5, (B, latent), jnp.float32)
    eps_mol = jax.random.normal(k6, (B, latent), jnp.float32)
    labels = jnp.zeros((n_nodes,), jnp.int32)
    beta = jnp.float32(0.1)

    assert int(batch_idx.min()) >= 0 and int(batch_idx.max()) < B

    fwd = jax.jit(functools.partial(jtnnvae_forward, ncand=ncand, tile_c=tile_c))
    out = fwd(prep, x_tree_vecs, x_mol_vecs, cand_vecs, batch_idx,
              eps_tree, eps_mol, labels, beta)
    out = jax.block_until_ready(out)
    total, kl_div, wacc, tacc, assm_loss, assm_acc, z_tree, z_mol, scores = out

    # ---- tight check: reference mirroring the kernel's bf16 MXU operands ----
    zt_q, zm_q, sc_q, kl_q = _latent_ref(params, x_tree_vecs, x_mol_vecs,
                                         cand_vecs, batch_idx, eps_tree,
                                         eps_mol, jnp.bfloat16)
    assert jnp.allclose(z_tree, zt_q, atol=1e-2, rtol=1e-2)
    assert jnp.allclose(z_mol, zm_q, atol=1e-2, rtol=1e-2)
    assert jnp.allclose(kl_div, kl_q, atol=1e-2, rtol=1e-2)
    assert jnp.allclose(scores, sc_q, atol=1e-2, rtol=1e-2)

    # ---- sanity check vs. the torch-faithful full-f32 reference -------------
    zt_f, zm_f, sc_f, kl_f = _latent_ref(params, x_tree_vecs, x_mol_vecs,
                                         cand_vecs, batch_idx, eps_tree,
                                         eps_mol, jnp.float32)
    assert jnp.allclose(z_tree, zt_f, atol=5e-2, rtol=5e-2)
    assert jnp.allclose(z_mol, zm_f, atol=5e-2, rtol=5e-2)
    assert jnp.allclose(kl_div, kl_f, atol=0.2, rtol=2e-2)
    assert jnp.allclose(scores, sc_f, atol=0.35, rtol=5e-2)
    assert jnp.isfinite(total)

    print("KERNEL_OK")
</pallas_src>

<mosaic_0001>
module attributes {stable_mosaic.version = 11 : i64} {
  func.func @_latent_kernel(%arg0: i32, %arg1: memref<4x128xbf16, #tpu.memory_space<vmem>>, %arg2: memref<4x128xbf16, #tpu.memory_space<vmem>>, %arg3: memref<128x256xbf16, #tpu.memory_space<vmem>>, %arg4: memref<1x256xf32, #tpu.memory_space<vmem>>, %arg5: memref<128x256xbf16, #tpu.memory_space<vmem>>, %arg6: memref<1x256xf32, #tpu.memory_space<vmem>>, %arg7: memref<128x128xbf16, #tpu.memory_space<vmem>>, %arg8: memref<4x128xf32, #tpu.memory_space<vmem>>, %arg9: memref<4x128xf32, #tpu.memory_space<vmem>>, %arg10: memref<128x128xbf16, #tpu.memory_space<vmem>>, %arg11: memref<1x128xi32, #tpu.memory_space<vmem>>, %arg12: memref<4x128xf32, #tpu.memory_space<vmem>>, %arg13: memref<4x128xf32, #tpu.memory_space<vmem>>, %arg14: memref<1x128xf32, #tpu.memory_space<vmem>>, %arg15: memref<1x1xf32, #tpu.memory_space<smem>>, %arg16: memref<4x128xbf16, #tpu.memory_space<vmem>>) attributes {dimension_semantics = [#tpu.dimension_semantics<arbitrary>], iteration_bounds = array<i64: 3>, scalar_prefetch = 0 : i64, scratch_operands = 1 : i64, tpu.core_type = #tpu.core_type<tc>, window_params = [{pipeline_mode = #tpu.pipeline_mode<synchronous>, transform_indices = @transform_0, window_bounds = array<i64: 4, 128>}, {pipeline_mode = #tpu.pipeline_mode<synchronous>, transform_indices = @transform_1, window_bounds = array<i64: 4, 128>}, {pipeline_mode = #tpu.pipeline_mode<synchronous>, transform_indices = @transform_2, window_bounds = array<i64: 128, 256>}, {pipeline_mode = #tpu.pipeline_mode<synchronous>, transform_indices = @transform_3, window_bounds = array<i64: 1, 256>}, {pipeline_mode = #tpu.pipeline_mode<synchronous>, transform_indices = @transform_4, window_bounds = array<i64: 128, 256>}, {pipeline_mode = #tpu.pipeline_mode<synchronous>, transform_indices = @transform_5, window_bounds = array<i64: 1, 256>}, {pipeline_mode = #tpu.pipeline_mode<synchronous>, transform_indices = @transform_6, window_bounds = array<i64: 128, 128>}, {pipeline_mode = #tpu.pipeline_mode<synchronous>, transform_indices = @transform_7, window_bounds = array<i64: 4, 128>}, {pipeline_mode = #tpu.pipeline_mode<synchronous>, transform_indices = @transform_8, window_bounds = array<i64: 4, 128>}, {transform_indices = @transform_9, window_bounds = array<i64: 128, 128>}, {transform_indices = @transform_10, window_bounds = array<i64: 1, 128>}, {pipeline_mode = #tpu.pipeline_mode<synchronous>, transform_indices = @transform_11, window_bounds = array<i64: 4, 128>}, {pipeline_mode = #tpu.pipeline_mode<synchronous>, transform_indices = @transform_12, window_bounds = array<i64: 4, 128>}, {transform_indices = @transform_13, window_bounds = array<i64: 1, 128>}, {transform_indices = @transform_14, window_bounds = array<i64: 1, 1>}]} {
    %c0_i32 = arith.constant 0 : i32
    %0 = arith.cmpi eq, %arg0, %c0_i32 : i32
    %1 = arith.extui %0 : i1 to i32
    %c0_i32_0 = arith.constant 0 : i32
    %2 = arith.cmpi ne, %1, %c0_i32_0 : i32
    scf.if %2 {
      %c0_10 = arith.constant 0 : index
      %c0_11 = arith.constant 0 : index
      %15 = vector.load %arg1[%c0_10, %c0_11] : memref<4x128xbf16, #tpu.memory_space<vmem>>, vector<4x128xbf16>
      %c0_12 = arith.constant 0 : index
      %c0_13 = arith.constant 0 : index
      %16 = vector.load %arg2[%c0_12, %c0_13] : memref<4x128xbf16, #tpu.memory_space<vmem>>, vector<4x128xbf16>
      %c0_14 = arith.constant 0 : index
      %c0_15 = arith.constant 0 : index
      %17 = vector.load %arg3[%c0_14, %c0_15] : memref<128x256xbf16, #tpu.memory_space<vmem>>, vector<128x256xbf16>
      %cst_16 = arith.constant dense<0.000000e+00> : vector<4x256xf32>
      %18 = tpu.matmul %15, %17, %cst_16 {dimension_numbers = #tpu.dot_dimension_numbers<[1], [0], [0], [1], [0, 0, 1, 1], [], []>} : vector<4x128xbf16>, vector<128x256xbf16>, vector<4x256xf32> -> vector<4x256xf32>
      %c0_17 = arith.constant 0 : index
      %c0_18 = arith.constant 0 : index
      %19 = vector.load %arg4[%c0_17, %c0_18] : memref<1x256xf32, #tpu.memory_space<vmem>>, vector<1x256xf32>
      %20 = vector.broadcast %19 : vector<1x256xf32> to vector<4x256xf32>
      %21 = arith.addf %18, %20 : vector<4x256xf32>
      %c0_19 = arith.constant 0 : index
      %c0_20 = arith.constant 0 : index
      %22 = vector.load %arg5[%c0_19, %c0_20] : memref<128x256xbf16, #tpu.memory_space<vmem>>, vector<128x256xbf16>
      %cst_21 = arith.constant dense<0.000000e+00> : vector<4x256xf32>
      %23 = tpu.matmul %16, %22, %cst_21 {dimension_numbers = #tpu.dot_dimension_numbers<[1], [0], [0], [1], [0, 0, 1, 1], [], []>} : vector<4x128xbf16>, vector<128x256xbf16>, vector<4x256xf32> -> vector<4x256xf32>
      %c0_22 = arith.constant 0 : index
      %c0_23 = arith.constant 0 : index
      %24 = vector.load %arg6[%c0_22, %c0_23] : memref<1x256xf32, #tpu.memory_space<vmem>>, vector<1x256xf32>
      %25 = vector.broadcast %24 : vector<1x256xf32> to vector<4x256xf32>
      %26 = arith.addf %23, %25 : vector<4x256xf32>
      %27 = vector.extract_strided_slice %21 {offsets = [0, 0], sizes = [4, 128], strides = [1, 1]} : vector<4x256xf32> to vector<4x128xf32>
      %28 = vector.extract_strided_slice %21 {offsets = [0, 128], sizes = [4, 128], strides = [1, 1]} : vector<4x256xf32> to vector<4x128xf32>
      %29 = math.absf %28 : vector<4x128xf32>
      %cst_24 = arith.constant 0.000000e+00 : f32
      %30 = vector.broadcast %cst_24 : f32 to vector<4x128xf32>
      %31 = arith.subf %30, %29 : vector<4x128xf32>
      %32 = vector.extract_strided_slice %26 {offsets = [0, 0], sizes = [4, 128], strides = [1, 1]} : vector<4x256xf32> to vector<4x128xf32>
      %33 = vector.extract_strided_slice %26 {offsets = [0, 128], sizes = [4, 128], strides = [1, 1]} : vector<4x256xf32> to vector<4x128xf32>
      %34 = math.absf %33 : vector<4x128xf32>
      %cst_25 = arith.constant 0.000000e+00 : f32
      %35 = vector.broadcast %cst_25 : f32 to vector<4x128xf32>
      %36 = arith.subf %35, %34 : vector<4x128xf32>
      %cst_26 = arith.constant 5.000000e-01 : f32
      %37 = vector.broadcast %cst_26 : f32 to vector<4x128xf32>
      %38 = arith.mulf %37, %31 : vector<4x128xf32>
      %39 = math.exp %38 : vector<4x128xf32>
      %cst_27 = arith.constant 5.000000e-01 : f32
      %40 = vector.broadcast %cst_27 : f32 to vector<4x128xf32>
      %41 = arith.mulf %40, %36 : vector<4x128xf32>
      %42 = math.exp %41 : vector<4x128xf32>
      %cst_28 = arith.constant 1.000000e+00 : f32
      %43 = vector.broadcast %cst_28 : f32 to vector<4x128xf32>
      %44 = arith.addf %43, %31 : vector<4x128xf32>
      %45 = arith.mulf %27, %27 : vector<4x128xf32>
      %46 = arith.subf %44, %45 : vector<4x128xf32>
      %47 = arith.mulf %39, %39 : vector<4x128xf32>
      %48 = arith.subf %46, %47 : vector<4x128xf32>
      %49 = vector.shape_cast %48 : vector<4x128xf32> to vector<1x4x128xf32>
      %cst_29 = arith.constant dense<0.000000e+00> : vector<1xf32>
      %50 = vector.multi_reduction <add>, %49, %cst_29 [1, 2] : vector<1x4x128xf32> to vector<1xf32>
      %51 = vector.shape_cast %50 : vector<1xf32> to vector<1x1x1xf32>
      %52 = vector.extract %51[0, 0, 0] : f32 from vector<1x1x1xf32>
      %cst_30 = arith.constant 1.000000e+00 : f32
      %53 = vector.broadcast %cst_30 : f32 to vector<4x128xf32>
      %54 = arith.addf %53, %36 : vector<4x128xf32>
      %55 = arith.mulf %32, %32 : vector<4x128xf32>
      %56 = arith.subf %54, %55 : vector<4x128xf32>
      %57 = arith.mulf %42, %42 : vector<4x128xf32>
      %58 = arith.subf %56, %57 : vector<4x128xf32>
      %59 = vector.shape_cast %58 : vector<4x128xf32> to vector<1x4x128xf32>
      %cst_31 = arith.constant dense<0.000000e+00> : vector<1xf32>
      %60 = vector.multi_reduction <add>, %59, %cst_31 [1, 2] : vector<1x4x128xf32> to vector<1xf32>
      %61 = vector.shape_cast %60 : vector<1xf32> to vector<1x1x1xf32>
      %62 = vector.extract %61[0, 0, 0] : f32 from vector<1x1x1xf32>
      %63 = arith.addf %52, %62 : f32
      %cst_32 = arith.constant -5.000000e-01 : f32
      %64 = arith.mulf %cst_32, %63 : f32
      %cst_33 = arith.constant 2.500000e-01 : f32
      %65 = arith.mulf %64, %cst_33 : f32
      %c0_34 = arith.constant 0 : index
      %c0_35 = arith.constant 0 : index
      %66 = memref.load %arg15[%c0_34, %c0_35] : memref<1x1xf32, #tpu.memory_space<smem>>
      memref.store %65, %arg15[%c0_34, %c0_35] : memref<1x1xf32, #tpu.memory_space<smem>>
      %c0_36 = arith.constant 0 : index
      %c0_37 = arith.constant 0 : index
      %67 = vector.load %arg8[%c0_36, %c0_37] : memref<4x128xf32, #tpu.memory_space<vmem>>, vector<4x128xf32>
      %68 = arith.mulf %39, %67 : vector<4x128xf32>
      %69 = arith.addf %27, %68 : vector<4x128xf32>
      %c0_38 = arith.constant 0 : index
      %c0_39 = arith.constant 0 : index
      %70 = vector.load %arg9[%c0_38, %c0_39] : memref<4x128xf32, #tpu.memory_space<vmem>>, vector<4x128xf32>
      %71 = arith.mulf %42, %70 : vector<4x128xf32>
      %72 = arith.addf %32, %71 : vector<4x128xf32>
      %c0_40 = arith.constant 0 : index
      %c0_41 = arith.constant 0 : index
      %73 = vector.load %arg12[%c0_40, %c0_41] : memref<4x128xf32, #tpu.memory_space<vmem>>, vector<4x128xf32>
      tpu.vector_store %arg12[%c0_40, %c0_41], %69 {strides = array<i32>} : memref<4x128xf32, #tpu.memory_space<vmem>>, vector<4x128xf32>,
      %c0_42 = arith.constant 0 : index
      %c0_43 = arith.constant 0 : index
      %74 = vector.load %arg13[%c0_42, %c0_43] : memref<4x128xf32, #tpu.memory_space<vmem>>, vector<4x128xf32>
      tpu.vector_store %arg13[%c0_42, %c0_43], %72 {strides = array<i32>} : memref<4x128xf32, #tpu.memory_space<vmem>>, vector<4x128xf32>,
      %75 = arith.truncf %72 : vector<4x128xf32> to vector<4x128xbf16>
      %c0_44 = arith.constant 0 : index
      %c0_45 = arith.constant 0 : index
      %76 = vector.load %arg7[%c0_44, %c0_45] : memref<128x128xbf16, #tpu.memory_space<vmem>>, vector<128x128xbf16>
      %cst_46 = arith.constant dense<0.000000e+00> : vector<4x128xf32>
      %77 = tpu.matmul %75, %76, %cst_46 {dimension_numbers = #tpu.dot_dimension_numbers<[1], [0], [0], [1], [0, 0, 1, 1], [], []>} : vector<4x128xbf16>, vector<128x128xbf16>, vector<4x128xf32> -> vector<4x128xf32>
      %78 = arith.truncf %77 : vector<4x128xf32> to vector<4x128xbf16>
      %c0_47 = arith.constant 0 : index
      %c0_48 = arith.constant 0 : index
      %79 = vector.load %arg16[%c0_47, %c0_48] : memref<4x128xbf16, #tpu.memory_space<vmem>>, vector<4x128xbf16>
      tpu.vector_store %arg16[%c0_47, %c0_48], %78 {strides = array<i32>} : memref<4x128xbf16, #tpu.memory_space<vmem>>, vector<4x128xbf16>,
    } else {
    }
    %c0 = arith.constant 0 : index
    %c0_1 = arith.constant 0 : index
    %3 = vector.load %arg10[%c0, %c0_1] : memref<128x128xbf16, #tpu.memory_space<vmem>>, vector<128x128xbf16>
    %c0_2 = arith.constant 0 : index
    %c0_3 = arith.constant 0 : index
    %4 = vector.load %arg16[%c0_2, %c0_3] : memref<4x128xbf16, #tpu.memory_space<vmem>>, vector<4x128xbf16>
    %cst = arith.constant dense<0.000000e+00> : vector<4x128xf32>
    %5 = tpu.matmul %4, %3, %cst {dimension_numbers = #tpu.dot_dimension_numbers<[1], [1], [0], [0], [0, 0, 1, 0], [], []>} : vector<4x128xbf16>, vector<128x128xbf16>, vector<4x128xf32> -> vector<4x128xf32>
    %c0_4 = arith.constant 0 : index
    %c0_5 = arith.constant 0 : index
    %6 = vector.load %arg11[%c0_4, %c0_5] : memref<1x128xi32, #tpu.memory_space<vmem>>, vector<1x128xi32>
    %7 = tpu.iota {dimensions = array<i32: 0>} : vector<4x128xi32>
    %8 = vector.broadcast %6 : vector<1x128xi32> to vector<4x128xi32>
    %9 = arith.cmpi eq, %8, %7 : vector<4x128xi32>
    %cst_6 = arith.constant 0.000000e+00 : f32
    %10 = vector.broadcast %cst_6 : f32 to vector<4x128xf32>
    %11 = arith.select %9, %5, %10 : vector<4x128xi1>, vector<4x128xf32>
    %cst_7 = arith.constant dense<0.000000e+00> : vector<128xf32>
    %12 = vector.multi_reduction <add>, %11, %cst_7 [0] : vector<4x128xf32> to vector<128xf32>
    %13 = vector.shape_cast %12 : vector<128xf32> to vector<1x128xf32>
    %c0_8 = arith.constant 0 : index
    %c0_9 = arith.constant 0 : index
    %14 = vector.load %arg14[%c0_8, %c0_9] : memref<1x128xf32, #tpu.memory_space<vmem>>, vector<1x128xf32>
    tpu.vector_store %arg14[%c0_8, %c0_9], %13 {strides = array<i32>} : memref<1x128xf32, #tpu.memory_space<vmem>>, vector<1x128xf32>,
    return
  }
  func.func @transform_0(%arg0: i32) -> (i32, i32) {
    %c0_i32 = arith.constant 0 : i32
    %c0_i32_0 = arith.constant 0 : i32
    %c0_i32_1 = arith.constant 0 : i32
    return %c0_i32, %c0_i32_0 : i32, i32
  }
  func.func @transform_1(%arg0: i32) -> (i32, i32) {
    %c0_i32 = arith.constant 0 : i32
    %c0_i32_0 = arith.constant 0 : i32
    %c0_i32_1 = arith.constant 0 : i32
    return %c0_i32, %c0_i32_0 : i32, i32
  }
  func.func @transform_2(%arg0: i32) -> (i32, i32) {
    %c0_i32 = arith.constant 0 : i32
    %c0_i32_0 = arith.constant 0 : i32
    %c0_i32_1 = arith.constant 0 : i32
    return %c0_i32, %c0_i32_0 : i32, i32
  }
  func.func @transform_3(%arg0: i32) -> (i32, i32) {
    %c0_i32 = arith.constant 0 : i32
    %c0_i32_0 = arith.constant 0 : i32
    %c0_i32_1 = arith.constant 0 : i32
    return %c0_i32, %c0_i32_0 : i32, i32
  }
  func.func @transform_4(%arg0: i32) -> (i32, i32) {
    %c0_i32 = arith.constant 0 : i32
    %c0_i32_0 = arith.constant 0 : i32
    %c0_i32_1 = arith.constant 0 : i32
    return %c0_i32, %c0_i32_0 : i32, i32
  }
  func.func @transform_5(%arg0: i32) -> (i32, i32) {
    %c0_i32 = arith.constant 0 : i32
    %c0_i32_0 = arith.constant 0 : i32
    %c0_i32_1 = arith.constant 0 : i32
    return %c0_i32, %c0_i32_0 : i32, i32
  }
  func.func @transform_6(%arg0: i32) -> (i32, i32) {
    %c0_i32 = arith.constant 0 : i32
    %c0_i32_0 = arith.constant 0 : i32
    %c0_i32_1 = arith.constant 0 : i32
    return %c0_i32, %c0_i32_0 : i32, i32
  }
  func.func @transform_7(%arg0: i32) -> (i32, i32) {
    %c0_i32 = arith.constant 0 : i32
    %c0_i32_0 = arith.constant 0 : i32
    %c0_i32_1 = arith.constant 0 : i32
    return %c0_i32, %c0_i32_0 : i32, i32
  }
  func.func @transform_8(%arg0: i32) -> (i32, i32) {
    %c0_i32 = arith.constant 0 : i32
    %c0_i32_0 = arith.constant 0 : i32
    %c0_i32_1 = arith.constant 0 : i32
    return %c0_i32, %c0_i32_0 : i32, i32
  }
  func.func @transform_9(%arg0: i32) -> (i32, i32) {
    %c0_i32 = arith.constant 0 : i32
    %c0_i32_0 = arith.constant 0 : i32
    return %arg0, %c0_i32 : i32, i32
  }
  func.func @transform_10(%arg0: i32) -> (i32, i32) {
    %c0_i32 = arith.constant 0 : i32
    %c0_i32_0 = arith.constant 0 : i32
    return %c0_i32, %arg0 : i32, i32
  }
  func.func @transform_11(%arg0: i32) -> (i32, i32) {
    %c0_i32 = arith.constant 0 : i32
    %c0_i32_0 = arith.constant 0 : i32
    %c0_i32_1 = arith.constant 0 : i32
    return %c0_i32, %c0_i32_0 : i32, i32
  }
  func.func @transform_12(%arg0: i32) -> (i32, i32) {
    %c0_i32 = arith.constant 0 : i32
    %c0_i32_0 = arith.constant 0 : i32
    %c0_i32_1 = arith.constant 0 : i32
    return %c0_i32, %c0_i32_0 : i32, i32
  }
  func.func @transform_13(%arg0: i32) -> (i32, i32) {
    %c0_i32 = arith.constant 0 : i32
    %c0_i32_0 = arith.constant 0 : i32
    return %c0_i32, %arg0 : i32, i32
  }
  func.func @transform_14(%arg0: i32) -> (i32, i32) {
    %c0_i32 = arith.constant 0 : i32
    %c0_i32_0 = arith.constant 0 : i32
    %c0_i32_1 = arith.constant 0 : i32
    return %c0_i32, %c0_i32_0 : i32, i32
  }
}

</mosaic_0001>

<llo_original>
// kernel: squeeze.6
$region0: #{squeeze.6}
  %s0 = inlined_call_operand.vmem [shape: f32[288], index: 0, kind: input, shape index: {}]
  %s1 = inlined_call_operand.vmem [shape: f32[48,6], index: 1, kind: output, shape index: {}]
  $region1: #{squeeze.6} parent=0
    #allocation0 [shape = 'u8[4096]{0}', space=vmem, size = 0x1000, scoped, tag = 'scoped mem for input reshape']
    %s3 = sshllo.u32 0, 4
    %v4 = vld [vmem:[%s0] sm:%s3]
    %5 = vst [vmem:[#allocation0] sm:%s3] %v4
    %v6 = vld [vmem:[#allocation0] sm:$0x1]
    %vm7 = vcmask 48128
    %8 = vst.msk [vmem:[%s1] sm:$0x1] %vm7, %v6
    %s9 = scalar_lea.vmem [#allocation0], 2
    %v10 = vld [vmem:[%s9] sm:$0x1]
    %11 = vrot.lane.b32.xlu0 %v10, 126
    %v12 = vpop.permute.xlu0 %11
    %vm13 = vcmask 48128
    %s14 = scalar_lea.vmem %s1, 43
    %15 = vst.msk [vmem:[%s14] sm:$0x1] %vm13, %v12
    %s16 = scalar_lea.vmem [#allocation0], 1
    %v17 = vld [vmem:[%s16] sm:$0x1]
    %18 = vrot.lane.b32.xlu0 %v17, 124
    %v19 = vpop.permute.xlu0 %18
    %vm20 = vcmask 48128
    %s21 = scalar_lea.vmem %s1, 22
    %22 = vst.msk [vmem:[%s21] sm:$0x1] %vm20, %v19
    %v23 = vld [vmem:[#allocation0] sm:$0x1]
    %24 = vrot.lane.b32.xlu0 %v23, 122
    %v25 = vpop.permute.xlu0 %24
    %vm26 = vcmask 48128
    %s27 = scalar_lea.vmem %s1, 1
    %28 = vst.msk [vmem:[%s27] sm:$0x1] %vm26, %v25
    %s29 = scalar_lea.vmem [#allocation0], 2
    %v30 = vld [vmem:[%s29] sm:$0x1]
    %31 = vrot.lane.b32.xlu0 %v30, 120
    %v32 = vpop.permute.xlu0 %31
    %vm33 = vcmask 48128
    %s34 = scalar_lea.vmem %s1, 44
    %35 = vst.msk [vmem:[%s34] sm:$0x1] %vm33, %v32
    %s36 = scalar_lea.vmem [#allocation0], 1
    %v37 = vld [vmem:[%s36] sm:$0x1]
    %38 = vrot.lane.b32.xlu0 %v37, 118
    %v39 = vpop.permute.xlu0 %38
    %vm40 = vcmask 48128
    %s41 = scalar_lea.vmem %s1, 23
    %42 = vst.msk [vmem:[%s41] sm:$0x1] %vm40, %v39
    %v43 = vld [vmem:[#allocation0] sm:$0x1]
    %44 = vrot.lane.b32.xlu0 %v43, 116
    %v45 = vpop.permute.xlu0 %44
    %vm46 = vcmask 48128
    %s47 = scalar_lea.vmem %s1, 2
    %48 = vst.msk [vmem:[%s47] sm:$0x1] %vm46, %v45
    %s49 = scalar_lea.vmem [#allocation0], 2
    %v50 = vld [vmem:[%s49] sm:$0x1]
    %51 = vrot.lane.b32.xlu0 %v50, 114
    %v52 = vpop.permute.xlu0 %51
    %vm53 = vcmask 48128
    %s54 = scalar_lea.vmem %s1, 45
    %55 = vst.msk [vmem:[%s54] sm:$0x1] %vm53, %v52
    %s56 = scalar_lea.vmem [#allocation0], 1
    %v57 = vld [vmem:[%s56] sm:$0x1]
    %58 = vrot.lane.b32.xlu0 %v57, 112
    %v59 = vpop.permute.xlu0 %58
    %vm60 = vcmask 48128
    %s61 = scalar_lea.vmem %s1, 24
    %62 = vst.msk [vmem:[%s61] sm:$0x1] %vm60, %v59
    %v63 = vld [vmem:[#allocation0] sm:$0x1]
    %64 = vrot.lane.b32.xlu0 %v63, 110
    %v65 = vpop.permute.xlu0 %64
    %vm66 = vcmask 48128
    %s67 = scalar_lea.vmem %s1, 3
    %68 = vst.msk [vmem:[%s67] sm:$0x1] %vm66, %v65
    %s69 = scalar_lea.vmem [#allocation0], 2
    %v70 = vld [vmem:[%s69] sm:$0x1]
    %71 = vrot.lane.b32.xlu0 %v70, 108
    %v72 = vpop.permute.xlu0 %71
    %vm73 = vcmask 48128
    %s74 = scalar_lea.vmem %s1, 46
    %75 = vst.msk [vmem:[%s74] sm:$0x1] %vm73, %v72
    %s76 = scalar_lea.vmem [#allocation0], 1
    %v77 = vld [vmem:[%s76] sm:$0x1]
    %78 = vrot.lane.b32.xlu0 %v77, 106
    %v79 = vpop.permute.xlu0 %78
    %vm80 = vcmask 48128
    %s81 = scalar_lea.vmem %s1, 25
    %82 = vst.msk [vmem:[%s81] sm:$0x1] %vm80, %v79
    %v83 = vld [vmem:[#allocation0] sm:$0x1]
    %84 = vrot.lane.b32.xlu0 %v83, 104
    %v85 = vpop.permute.xlu0 %84
    %vm86 = vcmask 48128
    %s87 = scalar_lea.vmem %s1, 4
    %88 = vst.msk [vmem:[%s87] sm:$0x1] %vm86, %v85
    %s89 = scalar_lea.vmem [#allocation0], 2
    %v90 = vld [vmem:[%s89] sm:$0x1]
    %91 = vrot.lane.b32.xlu0 %v90, 102
    %v92 = vpop.permute.xlu0 %91
    %vm93 = vcmask 48128
    %s94 = scalar_lea.vmem %s1, 47
    %95 = vst.msk [vmem:[%s94] sm:$0x1] %vm93, %v92
    %s96 = scalar_lea.vmem [#allocation0], 1
    %v97 = vld [vmem:[%s96] sm:$0x1]
    %98 = vrot.lane.b32.xlu0 %v97, 100
    %v99 = vpop.permute.xlu0 %98
    %vm100 = vcmask 48128
    %s101 = scalar_lea.vmem %s1, 26
    %102 = vst.msk [vmem:[%s101] sm:$0x1] %vm100, %v99
    %v103 = vld [vmem:[#allocation0] sm:$0x1]
    %104 = vrot.lane.b32.xlu0 %v103, 98
    %v105 = vpop.permute.xlu0 %104
    %vm106 = vcmask 48128
    %s107 = scalar_lea.vmem %s1, 5
    %108 = vst.msk [vmem:[%s107] sm:$0x1] %vm106, %v105
    %s109 = scalar_lea.vmem [#allocation0], 1
    %v110 = vld [vmem:[%s109] sm:$0x1]
    %111 = vrot.lane.b32.xlu0 %v110, 94
    %v112 = vpop.permute.xlu0 %111
    %vm113 = vcmask 48128
    %s114 = scalar_lea.vmem %s1, 27
    %115 = vst.msk [vmem:[%s114] sm:$0x1] %vm113, %v112
    %v116 = vld [vmem:[#allocation0] sm:$0x1]
    %117 = vrot.lane.b32.xlu0 %v116, 92
    %v118 = vpop.permute.xlu0 %117
    %vm119 = vcmask 48128
    %s120 = scalar_lea.vmem %s1, 6
    %121 = vst.msk [vmem:[%s120] sm:$0x1] %vm119, %v118
    %s122 = scalar_lea.vmem [#allocation0], 1
    %v123 = vld [vmem:[%s122] sm:$0x1]
    %124 = vrot.lane.b32.xlu0 %v123, 88
    %v125 = vpop.permute.xlu0 %124
    %vm126 = vcmask 48128
    %s127 = scalar_lea.vmem %s1, 28
    %128 = vst.msk [vmem:[%s127] sm:$0x1] %vm126, %v125
    %v129 = vld [vmem:[#allocation0] sm:$0x1]
    %130 = vrot.lane.b32.xlu0 %v129, 86
    %v131 = vpop.permute.xlu0 %130
    %vm132 = vcmask 48128
    %s133 = scalar_lea.vmem %s1, 7
    %134 = vst.msk [vmem:[%s133] sm:$0x1] %vm132, %v131
    %s135 = scalar_lea.vmem [#allocation0], 1
    %v136 = vld [vmem:[%s135] sm:$0x1]
    %137 = vrot.lane.b32.xlu0 %v136, 82
    %v138 = vpop.permute.xlu0 %137
    %vm139 = vcmask 48128
    %s140 = scalar_lea.vmem %s1, 29
    %141 = vst.msk [vmem:[%s140] sm:$0x1] %vm139, %v138
    %v142 = vld [vmem:[#allocation0] sm:$0x1]
    %143 = vrot.lane.b32.xlu0 %v142, 80
    %v144 = vpop.permute.xlu0 %143
    %vm145 = vcmask 48128
    %s146 = scalar_lea.vmem %s1, 8
    %147 = vst.msk [vmem:[%s146] sm:$0x1] %vm145, %v144
    %s148 = scalar_lea.vmem [#allocation0], 1
    %v149 = vld [vmem:[%s148] sm:$0x1]
    %150 = vrot.lane.b32.xlu0 %v149, 76
    %v151 = vpop.permute.xlu0 %150
    %vm152 = vcmask 48128
    %s153 = scalar_lea.vmem %s1, 30
    %154 = vst.msk [vmem:[%s153] sm:$0x1] %vm152, %v151
    %v155 = vld [vmem:[#allocation0] sm:$0x1]
    %156 = vrot.lane.b32.xlu0 %v155, 74
    %v157 = vpop.permute.xlu0 %156
    %vm158 = vcmask 48128
    %s159 = scalar_lea.vmem %s1, 9
    %160 = vst.msk [vmem:[%s159] sm:$0x1] %vm158, %v157
    %s161 = scalar_lea.vmem [#allocation0], 1
    %v162 = vld [vmem:[%s161] sm:$0x1]
    %163 = vrot.lane.b32.xlu0 %v162, 70
    %v164 = vpop.permute.xlu0 %163
    %vm165 = vcmask 48128
    %s166 = scalar_lea.vmem %s1, 31
    %167 = vst.msk [vmem:[%s166] sm:$0x1] %vm165, %v164
    %v168 = vld [vmem:[#allocation0] sm:$0x1]
    %169 = vrot.lane.b32.xlu0 %v168, 68
    %v170 = vpop.permute.xlu0 %169
    %vm171 = vcmask 48128
    %s172 = scalar_lea.vmem %s1, 10
    %173 = vst.msk [vmem:[%s172] sm:$0x1] %vm171, %v170
    %s174 = scalar_lea.vmem [#allocation0], 1
    %v175 = vld [vmem:[%s174] sm:$0x1]
    %176 = vrot.lane.b32.xlu0 %v175, 64
    %v177 = vpop.permute.xlu0 %176
    %vm178 = vcmask 48128
    %s179 = scalar_lea.vmem %s1, 32
    %180 = vst.msk [vmem:[%s179] sm:$0x1] %vm178, %v177
    %v181 = vld [vmem:[#allocation0] sm:$0x1]
    %182 = vrot.lane.b32.xlu0 %v181, 62
    %v183 = vpop.permute.xlu0 %182
    %vm184 = vcmask 48128
    %s185 = scalar_lea.vmem %s1, 11
    %186 = vst.msk [vmem:[%s185] sm:$0x1] %vm184, %v183
    %s187 = scalar_lea.vmem [#allocation0], 1
    %v188 = vld [vmem:[%s187] sm:$0x1]
    %189 = vrot.lane.b32.xlu0 %v188, 58
    %v190 = vpop.permute.xlu0 %189
    %vm191 = vcmask 48128
    %s192 = scalar_lea.vmem %s1, 33
    %193 = vst.msk [vmem:[%s192] sm:$0x1] %vm191, %v190
    %v194 = vld [vmem:[#allocation0] sm:$0x1]
    %195 = vrot.lane.b32.xlu0 %v194, 56
    %v196 = vpop.permute.xlu0 %195
    %vm197 = vcmask 48128
    %s198 = scalar_lea.vmem %s1, 12
    %199 = vst.msk [vmem:[%s198] sm:$0x1] %vm197, %v196
    %s200 = scalar_lea.vmem [#allocation0], 1
    %v201 = vld [vmem:[%s200] sm:$0x1]
    %202 = vrot.lane.b32.xlu0 %v201, 52
    %v203 = vpop.permute.xlu0 %202
    %vm204 = vcmask 48128
    %s205 = scalar_lea.vmem %s1, 34
    %206 = vst.msk [vmem:[%s205] sm:$0x1] %vm204, %v203
    %v207 = vld [vmem:[#allocation0] sm:$0x1]
    %208 = vrot.lane.b32.xlu0 %v207, 50
    %v209 = vpop.permute.xlu0 %208
    %vm210 = vcmask 48128
    %s211 = scalar_lea.vmem %s1, 13
    %212 = vst.msk [vmem:[%s211] sm:$0x1] %vm210, %v209
    %s213 = scalar_lea.vmem [#allocation0], 1
    %v214 = vld [vmem:[%s213] sm:$0x1]
    %215 = vrot.lane.b32.xlu0 %v214, 46
    %v216 = vpop.permute.xlu0 %215
    %vm217 = vcmask 48128
    %s218 = scalar_lea.vmem %s1, 35
    %219 = vst.msk [vmem:[%s218] sm:$0x1] %vm217, %v216
    %v220 = vld [vmem:[#allocation0] sm:$0x1]
    %221 = vrot.lane.b32.xlu0 %v220, 44
    %v222 = vpop.permute.xlu0 %221
    %vm223 = vcmask 48128
    %s224 = scalar_lea.vmem %s1, 14
    %225 = vst.msk [vmem:[%s224] sm:$0x1] %vm223, %v222
    %s226 = scalar_lea.vmem [#allocation0], 1
    %v227 = vld [vmem:[%s226] sm:$0x1]
    %228 = vrot.lane.b32.xlu0 %v227, 40
    %v229 = vpop.permute.xlu0 %228
    %vm230 = vcmask 48128
    %s231 = scalar_lea.vmem %s1, 36
    %232 = vst.msk [vmem:[%s231] sm:$0x1] %vm230, %v229
    %v233 = vld [vmem:[#allocation0] sm:$0x1]
    %234 = vrot.lane.b32.xlu0 %v233, 38
    %v235 = vpop.permute.xlu0 %234
    %vm236 = vcmask 48128
    %s237 = scalar_lea.vmem %s1, 15
    %238 = vst.msk [vmem:[%s237] sm:$0x1] %vm236, %v235
    %s239 = scalar_lea.vmem [#allocation0], 1
    %v240 = vld [vmem:[%s239] sm:$0x1]
    %241 = vrot.lane.b32.xlu0 %v240, 34
    %v242 = vpop.permute.xlu0 %241
    %vm243 = vcmask 48128
    %s244 = scalar_lea.vmem %s1, 37
    %245 = vst.msk [vmem:[%s244] sm:$0x1] %vm243, %v242
    %v246 = vld [vmem:[#allocation0] sm:$0x1]
    %247 = vrot.lane.b32.xlu0 %v246, 32
    %v248 = vpop.permute.xlu0 %247
    %vm249 = vcmask 48128
    %s250 = scalar_lea.vmem %s1, 16
    %251 = vst.msk [vmem:[%s250] sm:$0x1] %vm249, %v248
    %s252 = scalar_lea.vmem [#allocation0], 1
    %v253 = vld [vmem:[%s252] sm:$0x1]
    %254 = vrot.lane.b32.xlu0 %v253, 28
    %v255 = vpop.permute.xlu0 %254
    %vm256 = vcmask 48128
    %s257 = scalar_lea.vmem %s1, 38
    %258 = vst.msk [vmem:[%s257] sm:$0x1] %vm256, %v255
    %v259 = vld [vmem:[#allocation0] sm:$0x1]
    %260 = vrot.lane.b32.xlu0 %v259, 26
    %v261 = vpop.permute.xlu0 %260
    %vm262 = vcmask 48128
    %s263 = scalar_lea.vmem %s1, 17
    %264 = vst.msk [vmem:[%s263] sm:$0x1] %vm262, %v261
    %s265 = scalar_lea.vmem [#allocation0], 1
    %v266 = vld [vmem:[%s265] sm:$0x1]
    %267 = vrot.lane.b32.xlu0 %v266, 22
    %v268 = vpop.permute.xlu0 %267
    %vm269 = vcmask 48128
    %s270 = scalar_lea.vmem %s1, 39
    %271 = vst.msk [vmem:[%s270] sm:$0x1] %vm269, %v268
    %v272 = vld [vmem:[#allocation0] sm:$0x1]
    %273 = vrot.lane.b32.xlu0 %v272, 20
    %v274 = vpop.permute.xlu0 %273
    %vm275 = vcmask 48128
    %s276 = scalar_lea.vmem %s1, 18
    %277 = vst.msk [vmem:[%s276] sm:$0x1] %vm275, %v274
    %s278 = scalar_lea.vmem [#allocation0], 1
    %v279 = vld [vmem:[%s278] sm:$0x1]
    %280 = vrot.lane.b32.xlu0 %v279, 16
    %v281 = vpop.permute.xlu0 %280
    %vm282 = vcmask 48128
    %s283 = scalar_lea.vmem %s1, 40
    %284 = vst.msk [vmem:[%s283] sm:$0x1] %vm282, %v281
    %v285 = vld [vmem:[#allocation0] sm:$0x1]
    %286 = vrot.lane.b32.xlu0 %v285, 14
    %v287 = vpop.permute.xlu0 %286
    %vm288 = vcmask 48128
    %s289 = scalar_lea.vmem %s1, 19
    %290 = vst.msk [vmem:[%s289] sm:$0x1] %vm288, %v287
    %s291 = scalar_lea.vmem [#allocation0], 1
    %v292 = vld [vmem:[%s291] sm:$0x1]
    %293 = vrot.lane.b32.xlu0 %v292, 10
    %v294 = vpop.permute.xlu0 %293
    %vm295 = vcmask 48128
    %s296 = scalar_lea.vmem %s1, 41
    %297 = vst.msk [vmem:[%s296] sm:$0x1] %vm295, %v294
    %v298 = vld [vmem:[#allocation0] sm:$0x1]
    %299 = vrot.lane.b32.xlu0 %v298, 8
    %v300 = vpop.permute.xlu0 %299
    %vm301 = vcmask 48128
    %s302 = scalar_lea.vmem %s1, 20
    %303 = vst.msk [vmem:[%s302] sm:$0x1] %vm301, %v300
    %s304 = scalar_lea.vmem [#allocation0], 1
    %v305 = vld [vmem:[%s304] sm:$0x1]
    %s306 = scalar_lea.vmem [#allocation0], 2
    %v307 = vld [vmem:[%s306] sm:$0x1]
    %vm308 = vcmask 1014784
    %v309 = vsel %vm308, %v307, %v305
    %310 = vrot.lane.b32.xlu0 %v309, 4
    %v311 = vpop.permute.xlu0 %310
    %vm312 = vcmask 31744
    %s313 = scalar_lea.vmem %s1, 42
    %314 = vst.msk [vmem:[%s313] sm:$0x1] %vm312, %v311
    %vm315 = vcmask 48160
    %s316 = scalar_lea.vmem %s1, 42
    %317 = vst.msk [vmem:[%s316] sm:$0x1] %vm315, %v311
    %v318 = vld [vmem:[#allocation0] sm:$0x1]
    %s319 = scalar_lea.vmem [#allocation0], 1
    %v320 = vld [vmem:[%s319] sm:$0x1]
    %vm321 = vcmask 1031168
    %v322 = vsel %vm321, %v320, %v318
    %323 = vrot.lane.b32.xlu0 %v322, 2
    %v324 = vpop.permute.xlu0 %323
    %vm325 = vcmask 15360
    %s326 = scalar_lea.vmem %s1, 21
    %327 = vst.msk [vmem:[%s326] sm:$0x1] %vm325, %v324
    %vm328 = vcmask 48144
    %s329 = scalar_lea.vmem %s1, 21
    %330 = vst.msk [vmem:[%s329] sm:$0x1] %vm328, %v324

// kernel: jtnnvae_forward.1
$region0: #{jtnnvae_forward.1}
  #allocation0 [shape = 'u32[]', space=smem, size = 0x4, offset = 0x4, fixed_abs, tag = 'smem constant byte address 0x4 - core index']
  #allocation1 [shape = 'u32[144,128]{1,0:T(1,128)}', space=vmem, size = 0x12000, scoped, tag = 'internal scratch']
  #allocation2 [shape = 'bf16[4,128]{1,0:T(4,128)(2,1)}', space=vmem, size = 0x400, scoped, tag = 'scratch operand']
  %s0 = inlined_call_operand.vmem [shape: bf16[4,128], index: 0, kind: input, shape index: {}]
  %s1 = inlined_call_operand.vmem [shape: bf16[4,128], index: 1, kind: input, shape index: {}]
  %s2 = inlined_call_operand.vmem [shape: bf16[128,256], index: 2, kind: input, shape index: {}]
  %s3 = inlined_call_operand.vmem [shape: f32[1,256], index: 3, kind: input, shape index: {}]
  %s4 = inlined_call_operand.vmem [shape: bf16[128,256], index: 4, kind: input, shape index: {}]
  %s5 = inlined_call_operand.vmem [shape: f32[1,256], index: 5, kind: input, shape index: {}]
  %s6 = inlined_call_operand.vmem [shape: bf16[128,128], index: 6, kind: input, shape index: {}]
  %s7 = inlined_call_operand.vmem [shape: f32[4,128], index: 7, kind: input, shape index: {}]
  %s8 = inlined_call_operand.vmem [shape: f32[4,128], index: 8, kind: input, shape index: {}]
  %s9 = inlined_call_operand.vmem [shape: bf16[384,128], index: 9, kind: input, shape index: {}]
  %s10 = inlined_call_operand.vmem [shape: s32[1,384], index: 10, kind: input, shape index: {}]
  %s11 = inlined_call_operand.hbm [shape: f32[4,128], index: 11, kind: output, shape index: {0}]
  %s12 = inlined_call_operand.hbm [shape: f32[4,128], index: 12, kind: output, shape index: {1}]
  %s13 = inlined_call_operand.vmem [shape: f32[1,384], index: 13, kind: output, shape index: {2}]
  %s14 = inlined_call_operand.hbm [shape: f32[1,1], index: 14, kind: output, shape index: {3}]
  %15 = xla_tuple %s11, %s12, %s13, %s14
  %s16 = sld [smem:[#allocation0]]
  $region105: #{jtnnvae_forward.1} parent=0
    _
  %s18 = ssub.s32 1, %s16
  %s19 = scalar_select 0, %s18, %s16
  $region1: #{jtnnvae_forward.1} parent=0
    #allocation3 [shape = 'u8[2048]{0}', space=vmem, size = 0x800, scoped, tag = 'output window, operand 0, single buffered']
    #allocation4 [shape = 's32[2]{0}', space=sflag, size = 0x8, scoped, tag = 'scoped memory for jtnnvae_forward.1']
    #allocation5 [shape = 's32[2]{0}', space=sflag, size = 0x8, scoped, tag = 'scoped memory for jtnnvae_forward.1']
    #allocation6 [shape = 'u8[2048]{0}', space=vmem, size = 0x800, scoped, tag = 'output window, operand 1, single buffered']
    #allocation7 [shape = 's32[1]{0}', space=sflag, size = 0x4, scoped, tag = 'scoped memory for jtnnvae_forward.1']
    #allocation8 [shape = 'u8[512]{0}', space=smem, size = 0x200, scoped, tag = 'output window, operand 3, single buffered']
    %20 = vsyncpa [#allocation4], 0
    %21 = vsyncpa [#allocation7], 0
    %22 = vsyncpa [#allocation5], 0
    loop: start=0, step=1, limit=5
    $region2: #{jtnnvae_forward.1} parent=1 // loop_pre_header
      _
    $region3: #{jtnnvae_forward.1} parent=1 // loop_header
      %s24 = sphi 0, %s28
      %p25 = scmp.ge.s32.totalorder %s24, 5
      %s32 = sphi 0, %s32
      %s34 = sphi 0, %s32
      %s35 = sphi 0, %s34
      %s49 = sphi 0, %s35
      %s53 = sphi 0, %s53
      %s55 = sphi 0, %s53
      %s56 = sphi 0, %s55
      %s70 = sphi 0, %s56
      %s74 = sphi 0, %s74
      %s76 = sphi 0, %s74
      %s77 = sphi 0, %s76
      %s91 = sphi 0, %s77
      %s95 = sphi 0, %s95
      %s97 = sphi 0, %s95
      %s98 = sphi 0, %s97
      %s112 = sphi 0, %s98
      %s116 = sphi 0, %s116
      %s118 = sphi 0, %s116
      %s119 = sphi 0, %s118
      %s133 = sphi 0, %s119
      %s137 = sphi 0, %s137
      %s139 = sphi 0, %s137
      %s140 = sphi 0, %s139
      %s154 = sphi 0, %s140
      %s158 = sphi 0, %s158
      %s160 = sphi 0, %s158
      %s161 = sphi 0, %s160
      %s175 = sphi 0, %s161
      %s179 = sphi 0, %s179
      %s181 = sphi 0, %s179
      %s182 = sphi 0, %s181
      %s196 = sphi 0, %s182
      %s200 = sphi 0, %s200
      %s202 = sphi 0, %s200
      %s203 = sphi 0, %s202
      %s217 = sphi 0, %s203
      %s223 = sphi 0, %s225
      %s226 = sphi 0, %s223
      %s227 = sphi 0, %s226
      %s243 = sphi 0, %s227
      %s249 = sphi 0, %s251
      %s252 = sphi 0, %s249
      %s253 = sphi 0, %s252
      %s269 = sphi 0, %s253
      %s273 = sphi 0, %s273
      %s275 = sphi 0, %s273
      %s276 = sphi 0, %s275
      %s290 = sphi 0, %s276
      %s294 = sphi 0, %s294
      %s296 = sphi 0, %s294
      %s297 = sphi 0, %s296
      %s311 = sphi 0, %s297
      %s317 = sphi 0, %s319
      %s320 = sphi 0, %s317
      %s321 = sphi 0, %s320
      %s337 = sphi 0, %s321
      %s341 = sphi 0, %s341
      %s343 = sphi 0, %s341
      %s344 = sphi 0, %s343
      %s358 = sphi 0, %s344
    $region4: #{jtnnvae_forward.1} parent=1 // loop_header_branch
      %27 = sbr.rel (%p25) target = $region8
    $region5: #{jtnnvae_forward.1} parent=1 // loop_body
      %s29 = ssub.s32 %s24, 1
      %s30 = ssub.s32 %s24, 2
      %s31 = sadd.s32 %s24, 1
      %s33 = sadd.s32 %s32, 1
      %p36 = scmp.eq.s32.totalorder %s24, 2
      %p37 = scmp.ne.s32.totalorder %s32, %s34
      %p38 = scmp.eq.s32.totalorder %s24, 0
      %p39 = por %p37, %p38
      %p40 = scmp.ne.s32.totalorder %s32, %s34
      %p41 = scmp.eq.s32.totalorder %s29, 2
      %p42 = por %p40, %p41
      %p43 = scmp.ne.s32.totalorder %s34, %s35
      %p44 = scmp.eq.s32.totalorder %s29, 0
      %p45 = por %p43, %p44
      %p46 = scmp.ne.s32.totalorder %s34, %s35
      %p47 = scmp.eq.s32.totalorder %s30, 2
      %p48 = por %p46, %p47
      %p50 = scmp.ne.s32.totalorder %s35, %s49
      %p51 = scmp.eq.s32.totalorder %s30, 0
      %p52 = por %p50, %p51
      %s54 = sadd.s32 %s53, 1
      %p57 = scmp.eq.s32.totalorder %s24, 2
      %p58 = scmp.ne.s32.totalorder %s53, %s55
      %p59 = scmp.eq.s32.totalorder %s24, 0
      %p60 = por %p58, %p59
      %p61 = scmp.ne.s32.totalorder %s53, %s55
      %p62 = scmp.eq.s32.totalorder %s29, 2
      %p63 = por %p61, %p62
      %p64 = scmp.ne.s32.totalorder %s55, %s56
      %p65 = scmp.eq.s32.totalorder %s29, 0
      %p66 = por %p64, %p65
      %p67 = scmp.ne.s32.totalorder %s55, %s56
      %p68 = scmp.eq.s32.totalorder %s30, 2
      %p69 = por %p67, %p68
      %p71 = scmp.ne.s32.totalorder %s56, %s70
      %p72 = scmp.eq.s32.totalorder %s30, 0
      %p73 = por %p71, %p72
      %s75 = sadd.s32 %s74, 1
      %p78 = scmp.eq.s32.totalorder %s24, 2
      %p79 = scmp.ne.s32.totalorder %s74, %s76
      %p80 = scmp.eq.s32.totalorder %s24, 0
      %p81 = por %p79, %p80
      %p82 = scmp.ne.s32.totalorder %s74, %s76
      %p83 = scmp.eq.s32.totalorder %s29, 2
      %p84 = por %p82, %p83
      %p85 = scmp.ne.s32.totalorder %s76, %s77
      %p86 = scmp.eq.s32.totalorder %s29, 0
      %p87 = por %p85, %p86
      %p88 = scmp.ne.s32.totalorder %s76, %s77
      %p89 = scmp.eq.s32.totalorder %s30, 2
      %p90 = por %p88, %p89
      %p92 = scmp.ne.s32.totalorder %s77, %s91
      %p93 = scmp.eq.s32.totalorder %s30, 0
      %p94 = por %p92, %p93
      %s96 = sadd.s32 %s95, 1
      %p99 = scmp.eq.s32.totalorder %s24, 2
      %p100 = scmp.ne.s32.totalorder %s95, %s97
      %p101 = scmp.eq.s32.totalorder %s24, 0
      %p102 = por %p100, %p101
      %p103 = scmp.ne.s32.totalorder %s95, %s97
      %p104 = scmp.eq.s32.totalorder %s29, 2
      %p105 = por %p103, %p104
      %p106 = scmp.ne.s32.totalorder %s97, %s98
      %p107 = scmp.eq.s32.totalorder %s29, 0
      %p108 = por %p106, %p107
      %p109 = scmp.ne.s32.totalorder %s97, %s98
      %p110 = scmp.eq.s32.totalorder %s30, 2
      %p111 = por %p109, %p110
      %p113 = scmp.ne.s32.totalorder %s98, %s112
      %p114 = scmp.eq.s32.totalorder %s30, 0
      %p115 = por %p113, %p114
      %s117 = sadd.s32 %s116, 1
      %p120 = scmp.eq.s32.totalorder %s24, 2
      %p121 = scmp.ne.s32.totalorder %s116, %s118
      %p122 = scmp.eq.s32.totalorder %s24, 0
      %p123 = por %p121, %p122
      %p124 = scmp.ne.s32.totalorder %s116, %s118
      %p125 = scmp.eq.s32.totalorder %s29, 2
      %p126 = por %p124, %p125
      %p127 = scmp.ne.s32.totalorder %s118, %s119
      %p128 = scmp.eq.s32.totalorder %s29, 0
      %p129 = por %p127, %p128
      %p130 = scmp.ne.s32.totalorder %s118, %s119
      %p131 = scmp.eq.s32.totalorder %s30, 2
      %p132 = por %p130, %p131
      %p134 = scmp.ne.s32.totalorder %s119, %s133
      %p135 = scmp.eq.s32.totalorder %s30, 0
      %p136 = por %p134, %p135
      %s138 = sadd.s32 %s137, 1
      %p141 = scmp.eq.s32.totalorder %s24, 2
      %p142 = scmp.ne.s32.totalorder %s137, %s139
      %p143 = scmp.eq.s32.totalorder %s24, 0
      %p144 = por %p142, %p143
      %p145 = scmp.ne.s32.totalorder %s137, %s139
      %p146 = scmp.eq.s32.totalorder %s29, 2
      %p147 = por %p145, %p146
      %p148 = scmp.ne.s32.totalorder %s139, %s140
      %p149 = scmp.eq.s32.totalorder %s29, 0
      %p150 = por %p148, %p149
      %p151 = scmp.ne.s32.totalorder %s139, %s140
      %p152 = scmp.eq.s32.totalorder %s30, 2
      %p153 = por %p151, %p152
      %p155 = scmp.ne.s32.totalorder %s140, %s154
      %p156 = scmp.eq.s32.totalorder %s30, 0
      %p157 = por %p155, %p156
      %s159 = sadd.s32 %s158, 1
      %p162 = scmp.eq.s32.totalorder %s24, 2
      %p163 = scmp.ne.s32.totalorder %s158, %s160
      %p164 = scmp.eq.s32.totalorder %s24, 0
      %p165 = por %p163, %p164
      %p166 = scmp.ne.s32.totalorder %s158, %s160
      %p167 = scmp.eq.s32.totalorder %s29, 2
      %p168 = por %p166, %p167
      %p169 = scmp.ne.s32.totalorder %s160, %s161
      %p170 = scmp.eq.s32.totalorder %s29, 0
      %p171 = por %p169, %p170
      %p172 = scmp.ne.s32.totalorder %s160, %s161
      %p173 = scmp.eq.s32.totalorder %s30, 2
      %p174 = por %p172, %p173
      %p176 = scmp.ne.s32.totalorder %s161, %s175
      %p177 = scmp.eq.s32.totalorder %s30, 0
      %p178 = por %p176, %p177
      %s180 = sadd.s32 %s179, 1
      %p183 = scmp.eq.s32.totalorder %s24, 2
      %p184 = scmp.ne.s32.totalorder %s179, %s181
      %p185 = scmp.eq.s32.totalorder %s24, 0
      %p186 = por %p184, %p185
      %p187 = scmp.ne.s32.totalorder %s179, %s181
      %p188 = scmp.eq.s32.totalorder %s29, 2
      %p189 = por %p187, %p188
      %p190 = scmp.ne.s32.totalorder %s181, %s182
      %p191 = scmp.eq.s32.totalorder %s29, 0
      %p192 = por %p190, %p191
      %p193 = scmp.ne.s32.totalorder %s181, %s182
      %p194 = scmp.eq.s32.totalorder %s30, 2
      %p195 = por %p193, %p194
      %p197 = scmp.ne.s32.totalorder %s182, %s196
      %p198 = scmp.eq.s32.totalorder %s30, 0
      %p199 = por %p197, %p198
      %s201 = sadd.s32 %s200, 1
      %p204 = scmp.eq.s32.totalorder %s24, 2
      %p205 = scmp.ne.s32.totalorder %s200, %s202
      %p206 = scmp.eq.s32.totalorder %s24, 0
      %p207 = por %p205, %p206
      %p208 = scmp.ne.s32.totalorder %s200, %s202
      %p209 = scmp.eq.s32.totalorder %s29, 2
      %p210 = por %p208, %p209
      %p211 = scmp.ne.s32.totalorder %s202, %s203
      %p212 = scmp.eq.s32.totalorder %s29, 0
      %p213 = por %p211, %p212
      %p214 = scmp.ne.s32.totalorder %s202, %s203
      %p215 = scmp.eq.s32.totalorder %s30, 2
      %p216 = por %p214, %p215
      %p218 = scmp.ne.s32.totalorder %s203, %s217
      %p219 = scmp.eq.s32.totalorder %s30, 0
      %p220 = por %p218, %p219
      %s221 = ssub.s32 %s24, %s31
      %p222 = scmp.eq.s32.totalorder %s221, 0
      %s224 = sadd.s32 %s223, 1
      %s225 = scalar_select %p222, %s223, %s224
      %p228 = pneg %p222
      %p229 = scmp.eq.s32.totalorder %s24, 2
      %p230 = por %p228, %p229
      %p231 = scmp.ne.s32.totalorder %s223, %s226
      %p232 = scmp.eq.s32.totalorder %s24, 0
      %p233 = por %p231, %p232
      %p234 = scmp.ne.s32.totalorder %s223, %s226
      %p235 = scmp.eq.s32.totalorder %s29, 2
      %p236 = por %p234, %p235
      %p237 = scmp.ne.s32.totalorder %s226, %s227
      %p238 = scmp.eq.s32.totalorder %s29, 0
      %p239 = por %p237, %p238
      %p240 = scmp.ne.s32.totalorder %s226, %s227
      %p241 = scmp.eq.s32.totalorder %s30, 2
      %p242 = por %p240, %p241
      %p244 = scmp.ne.s32.totalorder %s227, %s243
      %p245 = scmp.eq.s32.totalorder %s30, 0
      %p246 = por %p244, %p245
      %s247 = ssub.s32 %s24, %s31
      %p248 = scmp.eq.s32.totalorder %s247, 0
      %s250 = sadd.s32 %s249, 1
      %s251 = scalar_select %p248, %s249, %s250
      %p254 = pneg %p248
      %p255 = scmp.eq.s32.totalorder %s24, 2
      %p256 = por %p254, %p255
      %p257 = scmp.ne.s32.totalorder %s249, %s252
      %p258 = scmp.eq.s32.totalorder %s24, 0
      %p259 = por %p257, %p258
      %p260 = scmp.ne.s32.totalorder %s249, %s252
      %p261 = scmp.eq.s32.totalorder %s29, 2
      %p262 = por %p260, %p261
      %p263 = scmp.ne.s32.totalorder %s252, %s253
      %p264 = scmp.eq.s32.totalorder %s29, 0
      %p265 = por %p263, %p264
      %p266 = scmp.ne.s32.totalorder %s252, %s253
      %p267 = scmp.eq.s32.totalorder %s30, 2
      %p268 = por %p266, %p267
      %p270 = scmp.ne.s32.totalorder %s253, %s269
      %p271 = scmp.eq.s32.totalorder %s30, 0
      %p272 = por %p270, %p271
      %s274 = sadd.s32 %s273, 1
      %p277 = scmp.eq.s32.totalorder %s24, 2
      %p278 = scmp.ne.s32.totalorder %s273, %s275
      %p279 = scmp.eq.s32.totalorder %s24, 0
      %p280 = por %p278, %p279
      %p281 = scmp.ne.s32.totalorder %s273, %s275
      %p282 = scmp.eq.s32.totalorder %s29, 2
      %p283 = por %p281, %p282
      %p284 = scmp.ne.s32.totalorder %s275, %s276
      %p285 = scmp.eq.s32.totalorder %s29, 0
      %p286 = por %p284, %p285
      %p287 = scmp.ne.s32.totalorder %s275, %s276
      %p288 = scmp.eq.s32.totalorder %s30, 2
      %p289 = por %p287, %p288
      %p291 = scmp.ne.s32.totalorder %s276, %s290
      %p292 = scmp.eq.s32.totalorder %s30, 0
      %p293 = por %p291, %p292
      %s295 = sadd.s32 %s294, 1
      %p298 = scmp.eq.s32.totalorder %s24, 2
      %p299 = scmp.ne.s32.totalorder %s294, %s296
      %p300 = scmp.eq.s32.totalorder %s24, 0
      %p301 = por %p299, %p300
      %p302 = scmp.ne.s32.totalorder %s294, %s296
      %p303 = scmp.eq.s32.totalorder %s29, 2
      %p304 = por %p302, %p303
      %p305 = scmp.ne.s32.totalorder %s296, %s297
      %p306 = scmp.eq.s32.totalorder %s29, 0
      %p307 = por %p305, %p306
      %p308 = scmp.ne.s32.totalorder %s296, %s297
      %p309 = scmp.eq.s32.totalorder %s30, 2
      %p310 = por %p308, %p309
      %p312 = scmp.ne.s32.totalorder %s297, %s311
      %p313 = scmp.eq.s32.totalorder %s30, 0
      %p314 = por %p312, %p313
      %s315 = ssub.s32 %s24, %s31
      %p316 = scmp.eq.s32.totalorder %s315, 0
      %s318 = sadd.s32 %s317, 1
      %s319 = scalar_select %p316, %s317, %s318
      %p322 = pneg %p316
      %p323 = scmp.eq.s32.totalorder %s24, 2
      %p324 = por %p322, %p323
      %p325 = scmp.ne.s32.totalorder %s317, %s320
      %p326 = scmp.eq.s32.totalorder %s24, 0
      %p327 = por %p325, %p326
      %p328 = scmp.ne.s32.totalorder %s317, %s320
      %p329 = scmp.eq.s32.totalorder %s29, 2
      %p330 = por %p328, %p329
      %p331 = scmp.ne.s32.totalorder %s320, %s321
      %p332 = scmp.eq.s32.totalorder %s29, 0
      %p333 = por %p331, %p332
      %p334 = scmp.ne.s32.totalorder %s320, %s321
      %p335 = scmp.eq.s32.totalorder %s30, 2
      %p336 = por %p334, %p335
      %p338 = scmp.ne.s32.totalorder %s321, %s337
      %p339 = scmp.eq.s32.totalorder %s30, 0
      %p340 = por %p338, %p339
      %s342 = sadd.s32 %s341, 1
      %p345 = scmp.eq.s32.totalorder %s24, 2
      %p346 = scmp.ne.s32.totalorder %s341, %s343
      %p347 = scmp.eq.s32.totalorder %s24, 0
      %p348 = por %p346, %p347
      %p349 = scmp.ne.s32.totalorder %s341, %s343
      %p350 = scmp.eq.s32.totalorder %s29, 2
      %p351 = por %p349, %p350
      %p352 = scmp.ne.s32.totalorder %s343, %s344
      %p353 = scmp.eq.s32.totalorder %s29, 0
      %p354 = por %p352, %p353
      %p355 = scmp.ne.s32.totalorder %s343, %s344
      %p356 = scmp.eq.s32.totalorder %s30, 2
      %p357 = por %p355, %p356
      %p359 = scmp.ne.s32.totalorder %s344, %s358
      %p360 = scmp.eq.s32.totalorder %s30, 0
      %p361 = por %p359, %p360
      %p362 = scmp.le.s32.totalorder 1, %s24
      %p363 = scmp.lt.s32.totalorder %s24, 4
      %p364 = pnand %p362, %p363
      %p365 = pneg %p364
      // Predicated region
      $region9: #{jtnnvae_forward.1} parent=5 // pred_check
        _
      $region10: #{jtnnvae_forward.1} parent=5 // pred_check_branch
        %367 = sbr.rel (%p364) target = $region12
      $region11: #{jtnnvae_forward.1} parent=5 // pred_region
        %s368 = ssub.s32 %s24, 1
        // Predicated region
        $region13: #{jtnnvae_forward.1} parent=11 // pred_check
          %p369 = pneg %p45
        $region14: #{jtnnvae_forward.1} parent=11 // pred_check_branch
          %371 = sbr.rel (%p369) target = $region16
        $region15: #{jtnnvae_forward.1} parent=11 // pred_region
          _
        $region16: #{jtnnvae_forward.1} parent=11 // pred_fallthru
          _
        // Predicated region
        $region17: #{jtnnvae_forward.1} parent=11 // pred_check
          %p372 = pneg %p66
        $region18: #{jtnnvae_forward.1} parent=11 // pred_check_branch
          %374 = sbr.rel (%p372) target = $region20
        $region19: #{jtnnvae_forward.1} parent=11 // pred_region
          _
        $region20: #{jtnnvae_forward.1} parent=11 // pred_fallthru
          _
        // Predicated region
        $region21: #{jtnnvae_forward.1} parent=11 // pred_check
          %p375 = pneg %p87
        $region22: #{jtnnvae_forward.1} parent=11 // pred_check_branch
          %377 = sbr.rel (%p375) target = $region24
        $region23: #{jtnnvae_forward.1} parent=11 // pred_region
          _
        $region24: #{jtnnvae_forward.1} parent=11 // pred_fallthru
          _
        // Predicated region
        $region25: #{jtnnvae_forward.1} parent=11 // pred_check
          %p378 = pneg %p108
        $region26: #{jtnnvae_forward.1} parent=11 // pred_check_branch
          %380 = sbr.rel (%p378) target = $region28
        $region27: #{jtnnvae_forward.1} parent=11 // pred_region
          _
        $region28: #{jtnnvae_forward.1} parent=11 // pred_fallthru
          _
        // Predicated region
        $region29: #{jtnnvae_forward.1} parent=11 // pred_check
          %p381 = pneg %p129
        $region30: #{jtnnvae_forward.1} parent=11 // pred_check_branch
          %383 = sbr.rel (%p381) target = $region32
        $region31: #{jtnnvae_forward.1} parent=11 // pred_region
          _
        $region32: #{jtnnvae_forward.1} parent=11 // pred_fallthru
          _
        // Predicated region
        $region33: #{jtnnvae_forward.1} parent=11 // pred_check
          %p384 = pneg %p150
        $region34: #{jtnnvae_forward.1} parent=11 // pred_check_branch
          %386 = sbr.rel (%p384) target = $region36
        $region35: #{jtnnvae_forward.1} parent=11 // pred_region
          _
        $region36: #{jtnnvae_forward.1} parent=11 // pred_fallthru
          _
        // Predicated region
        $region37: #{jtnnvae_forward.1} parent=11 // pred_check
          %p387 = pneg %p171
        $region38: #{jtnnvae_forward.1} parent=11 // pred_check_branch
          %389 = sbr.rel (%p387) target = $region40
        $region39: #{jtnnvae_forward.1} parent=11 // pred_region
          _
        $region40: #{jtnnvae_forward.1} parent=11 // pred_fallthru
          _
        // Predicated region
        $region41: #{jtnnvae_forward.1} parent=11 // pred_check
          %p390 = pneg %p192
        $region42: #{jtnnvae_forward.1} parent=11 // pred_check_branch
          %392 = sbr.rel (%p390) target = $region44
        $region43: #{jtnnvae_forward.1} parent=11 // pred_region
          _
        $region44: #{jtnnvae_forward.1} parent=11 // pred_fallthru
          _
        // Predicated region
        $region45: #{jtnnvae_forward.1} parent=11 // pred_check
          %p393 = pneg %p213
        $region46: #{jtnnvae_forward.1} parent=11 // pred_check_branch
          %395 = sbr.rel (%p393) target = $region48
        $region47: #{jtnnvae_forward.1} parent=11 // pred_region
          _
        $region48: #{jtnnvae_forward.1} parent=11 // pred_fallthru
          _
      $region12: #{jtnnvae_forward.1} parent=5 // pred_fallthru
        _
      %p396 = scmp.lt.s32.totalorder %s24, 3
      // Predicated region
      $region49: #{jtnnvae_forward.1} parent=5 // pred_check
        %p397 = pneg %p396
      $region50: #{jtnnvae_forward.1} parent=5 // pred_check_branch
        %399 = sbr.rel (%p397) target = $region52
      $region51: #{jtnnvae_forward.1} parent=5 // pred_region
        // Predicated region
        $region53: #{jtnnvae_forward.1} parent=51 // pred_check
          %p400 = pneg %p233
        $region54: #{jtnnvae_forward.1} parent=51 // pred_check_branch
          %402 = sbr.rel (%p400) target = $region56
        $region55: #{jtnnvae_forward.1} parent=51 // pred_region
          %s403 = smul.u32 16, %s24
          %p404 = scmp.lt.s32.totalorder %s403, 47
          %s405 = scalar_select %p404, %s403, 47
          %s406 = smul.addr %s405, 4
          %s407 = scalar_lea.vmem %s9, %s406
          %s408 = smul.u32 16, %s24
        $region56: #{jtnnvae_forward.1} parent=51 // pred_fallthru
          _
        // Predicated region
        $region57: #{jtnnvae_forward.1} parent=51 // pred_check
          %p409 = pneg %p259
        $region58: #{jtnnvae_forward.1} parent=51 // pred_check_branch
          %411 = sbr.rel (%p409) target = $region60
        $region59: #{jtnnvae_forward.1} parent=51 // pred_region
          %p412 = scmp.lt.s32.totalorder %s24, 2
          %s413 = scalar_select %p412, %s24, 2
          %s414 = scalar_lea.vmem %s10, %s413
        $region60: #{jtnnvae_forward.1} parent=51 // pred_fallthru
          _
      $region52: #{jtnnvae_forward.1} parent=5 // pred_fallthru
        _
      %p415 = scmp.le.s32.totalorder 1, %s24
      %p416 = scmp.lt.s32.totalorder %s24, 4
      %p417 = pnand %p415, %p416
      %p418 = pneg %p417
      // Predicated region
      $region61: #{jtnnvae_forward.1} parent=5 // pred_check
        _
      $region62: #{jtnnvae_forward.1} parent=5 // pred_check_branch
        %420 = sbr.rel (%p417) target = $region64
      $region63: #{jtnnvae_forward.1} parent=5 // pred_region
        %s421 = ssub.s32 %s24, 1
        %p422 = pneg %p45
        %p423 = pneg %p42
        %p424 = pneg %p66
        %p425 = pneg %p63
        %p426 = pneg %p87
        %p427 = pneg %p84
        %p428 = pneg %p108
        %p429 = pneg %p105
        %p430 = pneg %p129
        %p431 = pneg %p126
        %p432 = pneg %p150
        %p433 = pneg %p147
        %p434 = pneg %p171
        %p435 = pneg %p168
        %p436 = pneg %p192
        %p437 = pneg %p189
        %p438 = pneg %p213
        %p439 = pneg %p210
        %s440 = smul.u32 16, %s29
        %p441 = scmp.lt.s32.totalorder %s440, 47
        %s442 = scalar_select %p441, %s440, 47
        %s443 = smul.addr %s442, 4
        %s444 = scalar_lea.vmem %s9, %s443
        %p445 = pneg %p239
        %p446 = pneg %p236
        %p447 = scmp.lt.s32.totalorder %s29, 2
        %s448 = scalar_select %p447, %s29, 2
        %s449 = scalar_lea.vmem %s10, %s448
        %p450 = pneg %p265
        %p451 = pneg %p262
        %p452 = pneg %p286
        %p453 = pneg %p283
        %p454 = pneg %p307
        %p455 = pneg %p304
        %p456 = pneg %p333
        %p457 = pneg %p330
        %p458 = scmp.lt.s32.totalorder %s29, 2
        %s459 = scalar_select %p458, %s29, 2
        %s460 = scalar_lea.vmem %s13, %s459
        %p461 = pneg %p354
        %p462 = pneg %p351
        %s463 = smul.u32 16, %s29
        %p464 = scmp.lt.s32.totalorder %s463, 47
        %s465 = scalar_select %p464, %s463, 47
        %s466 = smul.addr %s465, 4
        %s467 = scalar_lea.vmem %s9, %s466
        %s468 = smul.u32 16, %s29
        %p469 = scmp.lt.s32.totalorder %s29, 2
        %s470 = scalar_select %p469, %s29, 2
        %s471 = scalar_lea.vmem %s10, %s470
        %p472 = scmp.lt.s32.totalorder %s29, 2
        %s473 = scalar_select %p472, %s29, 2
        %s474 = scalar_lea.vmem %s13, %s473
        %p476 = scmp.eq.s32.totalorder %s29, 0
        // Predicated region
        $region65: #{jtnnvae_forward.1} parent=63 // pred_check
          %p477 = pneg %p476
        $region66: #{jtnnvae_forward.1} parent=63 // pred_check_branch
          %479 = sbr.rel (%p477) target = $region68
        $region67: #{jtnnvae_forward.1} parent=63 // pred_region
          %v480 = vld [vmem:[%s0] sm:$0x3]
          %v481 = vld [vmem:[%s1] sm:$0x3]
          %v482 = vld [vmem:[%s2] sm:$0xff]
          %v483 = vld [vmem:[%s2 + $0x8] sm:$0xff]
          %v484 = vld [vmem:[%s2 + $0x10] sm:$0xff]
          %v485 = vld [vmem:[%s2 + $0x18] sm:$0xff]
          %v486 = vld [vmem:[%s2 + $0x20] sm:$0xff]
          %v487 = vld [vmem:[%s2 + $0x28] sm:$0xff]
          %v488 = vld [vmem:[%s2 + $0x30] sm:$0xff]
          %v489 = vld [vmem:[%s2 + $0x38] sm:$0xff]
          %v490 = vld [vmem:[%s2 + $0x40] sm:$0xff]
          %v491 = vld [vmem:[%s2 + $0x48] sm:$0xff]
          %v492 = vld [vmem:[%s2 + $0x50] sm:$0xff]
          %v493 = vld [vmem:[%s2 + $0x58] sm:$0xff]
          %v494 = vld [vmem:[%s2 + $0x60] sm:$0xff]
          %v495 = vld [vmem:[%s2 + $0x68] sm:$0xff]
          %v496 = vld [vmem:[%s2 + $0x70] sm:$0xff]
          %v497 = vld [vmem:[%s2 + $0x78] sm:$0xff]
          %v498 = vld [vmem:[%s3] sm:$0x3]
          %v500 = vlaneseq
          %v501 = vshrl.u32 %v500, 7
          %v502 = vsub.s32 0, %v501
          %v503 = vrot.slane %v498, %v502
          %v504 = vlaneseq
          %v505 = vshrl.u32 %v504, 7
          %v506 = vsub.s32 1, %v505
          %v507 = vrot.slane %v498, %v506
          %v526 = vunpack.c.l.b16 %v482
          %v527 = vunpack.c.h.b16 %v482
          %v528 = vunpack.c.l.b16 %v483
          %v529 = vunpack.c.h.b16 %v483
          %v530 = vunpack.c.l.b16 %v484
          %v531 = vunpack.c.h.b16 %v484
          %v532 = vunpack.c.l.b16 %v485
          %v533 = vunpack.c.h.b16 %v485
          %v534 = vunpack.c.l.b16 %v486
          %v535 = vunpack.c.h.b16 %v486
          %v536 = vunpack.c.l.b16 %v487
          %v537 = vunpack.c.h.b16 %v487
          %v538 = vunpack.c.l.b16 %v488
          %v539 = vunpack.c.h.b16 %v488
          %v540 = vunpack.c.l.b16 %v489
          %v541 = vunpack.c.h.b16 %v489
          %v542 = vunpack.c.l.b16 %v490
          %v543 = vunpack.c.h.b16 %v490
          %v544 = vunpack.c.l.b16 %v491
          %v545 = vunpack.c.h.b16 %v491
          %v546 = vunpack.c.l.b16 %v492
          %v547 = vunpack.c.h.b16 %v492
          %v548 = vunpack.c.l.b16 %v493
          %v549 = vunpack.c.h.b16 %v493
          %v550 = vunpack.c.l.b16 %v494
          %v551 = vunpack.c.h.b16 %v494
          %v552 = vunpack.c.l.b16 %v495
          %v553 = vunpack.c.h.b16 %v495
          %v554 = vunpack.c.l.b16 %v496
          %v555 = vunpack.c.h.b16 %v496
          %v556 = vunpack.c.l.b16 %v497
          %v557 = vunpack.c.h.b16 %v497
          %v558 = vpack.c.b16 %v528, %v526
          %v559 = vpack.c.b16 %v529, %v527
          %v560 = vpack.c.b16 %v532, %v530
          %v561 = vpack.c.b16 %v533, %v531
          %v562 = vpack.c.b16 %v536, %v534
          %v563 = vpack.c.b16 %v537, %v535
          %v564 = vpack.c.b16 %v540, %v538
          %v565 = vpack.c.b16 %v541, %v539
          %v566 = vpack.c.b16 %v544, %v542
          %v567 = vpack.c.b16 %v545, %v543
          %v568 = vpack.c.b16 %v548, %v546
          %v569 = vpack.c.b16 %v549, %v547
          %v570 = vpack.c.b16 %v552, %v550
          %v571 = vpack.c.b16 %v553, %v551
          %v572 = vpack.c.b16 %v556, %v554
          %v573 = vpack.c.b16 %v557, %v555
          %590 = vmatprep.subr.bf16.mxu0 %v559
          %591 = vmatpush1.bf16.msra.mxu0 %v558
          %592 = vmatprep.subr.bf16.mxu0 %v561
          %593 = vmatpush1.bf16.msra.mxu0 %v560
          %594 = vmatprep.subr.bf16.mxu0 %v563
          %595 = vmatpush1.bf16.msra.mxu0 %v562
          %596 = vmatprep.subr.bf16.mxu0 %v565
          %597 = vmatpush1.bf16.msra.mxu0 %v564
          %598 = vmatprep.subr.bf16.mxu0 %v567
          %599 = vmatpush1.bf16.msra.mxu0 %v566
          %600 = vmatprep.subr.bf16.mxu0 %v569
          %601 = vmatpush1.bf16.msra.mxu0 %v568
          %602 = vmatprep.subr.bf16.mxu0 %v571
          %603 = vmatpush1.bf16.msra.mxu0 %v570
          %604 = vmatprep.subr.bf16.mxu0 %v573
          %605 = vmatpush1.bf16.msra.mxu0 %v572
          %606 = vmatprep.subr.bf16.mxu0 0
          %607 = vmatpush1.bf16.msra.mxu0 0
          %608 = vmatprep.subr.bf16.mxu0 0
          %609 = vmatpush1.bf16.msra.mxu0 0
          %610 = vmatprep.subr.bf16.mxu0 0
          %611 = vmatpush1.bf16.msra.mxu0 0
          %612 = vmatprep.subr.bf16.mxu0 0
          %613 = vmatpush1.bf16.msra.mxu0 0
          %614 = vmatprep.subr.bf16.mxu0 0
          %615 = vmatpush1.bf16.msra.mxu0 0
          %616 = vmatprep.subr.bf16.mxu0 0
          %617 = vmatpush1.bf16.msra.mxu0 0
          %618 = vmatprep.subr.bf16.mxu0 0
          %619 = vmatpush1.bf16.msra.mxu0 0
          %620 = vmatprep.subr.bf16.mxu0 0
          %621 = vmatpush1.bf16.msra.mxu0 0
          %622 = vmatprep.mubr.bf16.mxu0 0
          %623 = vmatmul.mubr.bf16.gmra.mrb[0].mxu0 %v480
          %v624 = vpop.f32.mrb[0].mxu0
          %v625 = vadd.f32 %v503, %v624
          %v626 = vpop.f32.mrb[0].mxu0
          %v627 = vadd.f32 %v507, %v626
          %v628 = vpop.f32.mrb[0].mxu0
          %v629 = vpop.f32.mrb[0].mxu0
          %630 = vdwg.mxu0
          %v631 = vld [vmem:[%s4] sm:$0xff]
          %v632 = vld [vmem:[%s4 + $0x8] sm:$0xff]
          %v633 = vld [vmem:[%s4 + $0x10] sm:$0xff]
          %v634 = vld [vmem:[%s4 + $0x18] sm:$0xff]
          %v635 = vld [vmem:[%s4 + $0x20] sm:$0xff]
          %v636 = vld [vmem:[%s4 + $0x28] sm:$0xff]
          %v637 = vld [vmem:[%s4 + $0x30] sm:$0xff]
          %v638 = vld [vmem:[%s4 + $0x38] sm:$0xff]
          %v639 = vld [vmem:[%s4 + $0x40] sm:$0xff]
          %v640 = vld [vmem:[%s4 + $0x48] sm:$0xff]
          %v641 = vld [vmem:[%s4 + $0x50] sm:$0xff]
          %v642 = vld [vmem:[%s4 + $0x58] sm:$0xff]
          %v643 = vld [vmem:[%s4 + $0x60] sm:$0xff]
          %v644 = vld [vmem:[%s4 + $0x68] sm:$0xff]
          %v645 = vld [vmem:[%s4 + $0x70] sm:$0xff]
          %v646 = vld [vmem:[%s4 + $0x78] sm:$0xff]
          %v647 = vld [vmem:[%s5] sm:$0x3]
          %v649 = vlaneseq
          %v650 = vshrl.u32 %v649, 7
          %v651 = vsub.s32 0, %v650
          %v652 = vrot.slane %v647, %v651
          %v653 = vlaneseq
          %v654 = vshrl.u32 %v653, 7
          %v655 = vsub.s32 1, %v654
          %v656 = vrot.slane %v647, %v655
          %v675 = vunpack.c.l.b16 %v631
          %v676 = vunpack.c.h.b16 %v631
          %v677 = vunpack.c.l.b16 %v632
          %v678 = vunpack.c.h.b16 %v632
          %v679 = vunpack.c.l.b16 %v633
          %v680 = vunpack.c.h.b16 %v633
          %v681 = vunpack.c.l.b16 %v634
          %v682 = vunpack.c.h.b16 %v634
          %v683 = vunpack.c.l.b16 %v635
          %v684 = vunpack.c.h.b16 %v635
          %v685 = vunpack.c.l.b16 %v636
          %v686 = vunpack.c.h.b16 %v636
          %v687 = vunpack.c.l.b16 %v637
          %v688 = vunpack.c.h.b16 %v637
          %v689 = vunpack.c.l.b16 %v638
          %v690 = vunpack.c.h.b16 %v638
          %v691 = vunpack.c.l.b16 %v639
          %v692 = vunpack.c.h.b16 %v639
          %v693 = vunpack.c.l.b16 %v640
          %v694 = vunpack.c.h.b16 %v640
          %v695 = vunpack.c.l.b16 %v641
          %v696 = vunpack.c.h.b16 %v641
          %v697 = vunpack.c.l.b16 %v642
          %v698 = vunpack.c.h.b16 %v642
          %v699 = vunpack.c.l.b16 %v643
          %v700 = vunpack.c.h.b16 %v643
          %v701 = vunpack.c.l.b16 %v644
          %v702 = vunpack.c.h.b16 %v644
          %v703 = vunpack.c.l.b16 %v645
          %v704 = vunpack.c.h.b16 %v645
          %v705 = vunpack.c.l.b16 %v646
          %v706 = vunpack.c.h.b16 %v646
          %v707 = vpack.c.b16 %v677, %v675
          %v708 = vpack.c.b16 %v678, %v676
          %v709 = vpack.c.b16 %v681, %v679
          %v710 = vpack.c.b16 %v682, %v680
          %v711 = vpack.c.b16 %v685, %v683
          %v712 = vpack.c.b16 %v686, %v684
          %v713 = vpack.c.b16 %v689, %v687
          %v714 = vpack.c.b16 %v690, %v688
          %v715 = vpack.c.b16 %v693, %v691
          %v716 = vpack.c.b16 %v694, %v692
          %v717 = vpack.c.b16 %v697, %v695
          %v718 = vpack.c.b16 %v698, %v696
          %v719 = vpack.c.b16 %v701, %v699
          %v720 = vpack.c.b16 %v702, %v700
          %v721 = vpack.c.b16 %v705, %v703
          %v722 = vpack.c.b16 %v706, %v704
          %739 = vmatprep.subr.bf16.mxu0 %v708
          %740 = vmatpush1.bf16.msra.mxu0 %v707
          %741 = vmatprep.subr.bf16.mxu0 %v710
          %742 = vmatpush1.bf16.msra.mxu0 %v709
          %743 = vmatprep.subr.bf16.mxu0 %v712
          %744 = vmatpush1.bf16.msra.mxu0 %v711
          %745 = vmatprep.subr.bf16.mxu0 %v714
          %746 = vmatpush1.bf16.msra.mxu0 %v713
          %747 = vmatprep.subr.bf16.mxu0 %v716
          %748 = vmatpush1.bf16.msra.mxu0 %v715
          %749 = vmatprep.subr.bf16.mxu0 %v718
          %750 = vmatpush1.bf16.msra.mxu0 %v717
          %751 = vmatprep.subr.bf16.mxu0 %v720
          %752 = vmatpush1.bf16.msra.mxu0 %v719
          %753 = vmatprep.subr.bf16.mxu0 %v722
          %754 = vmatpush1.bf16.msra.mxu0 %v721
          %755 = vmatprep.subr.bf16.mxu0 0
          %756 = vmatpush1.bf16.msra.mxu0 0
          %757 = vmatprep.subr.bf16.mxu0 0
          %758 = vmatpush1.bf16.msra.mxu0 0
          %759 = vmatprep.subr.bf16.mxu0 0
          %760 = vmatpush1.bf16.msra.mxu0 0
          %761 = vmatprep.subr.bf16.mxu0 0
          %762 = vmatpush1.bf16.msra.mxu0 0
          %763 = vmatprep.subr.bf16.mxu0 0
          %764 = vmatpush1.bf16.msra.mxu0 0
          %765 = vmatprep.subr.bf16.mxu0 0
          %766 = vmatpush1.bf16.msra.mxu0 0
          %767 = vmatprep.subr.bf16.mxu0 0
          %768 = vmatpush1.bf16.msra.mxu0 0
          %769 = vmatprep.subr.bf16.mxu0 0
          %770 = vmatpush1.bf16.msra.mxu0 0
          %771 = vmatprep.mubr.bf16.mxu0 0
          %772 = vmatmul.mubr.bf16.gmra.mrb[0].mxu0 %v481
          %v773 = vpop.f32.mrb[0].mxu0
          %v774 = vadd.f32 %v652, %v773
          %v775 = vpop.f32.mrb[0].mxu0
          %v776 = vadd.f32 %v656, %v775
          %v777 = vpop.f32.mrb[0].mxu0
          %v778 = vpop.f32.mrb[0].mxu0
          %779 = vdwg.mxu0
          %v780 = vand.u32 2147483647, %v627
          %v781 = vsub.f32 0.0, %v780
          %v782 = vand.u32 2147483647, %v776
          %v783 = vsub.f32 0.0, %v782
          %v784 = vmul.f32 %v781, 0.5
          %v785 = vmul.f32 %v784, 1.442695
          %v786 = vpow.pop %v785
          %v787 = vmul.f32 %v783, 0.5
          %v788 = vmul.f32 %v787, 1.442695
          %v789 = vpow.pop %v788
          %v790 = vadd.f32 %v781, 1.0
          %v791 = vmul.f32 %v625, %v625
          %v792 = vsub.f32 %v790, %v791
          %v793 = vmul.f32 %v786, %v786
          %v794 = vsub.f32 %v792, %v793
          %vm795 = vcmask 1043456
          %v796 = vsel %vm795, %v794, 0.0
          %797 = vadd.xlane.f32.xlu0 %v796
          %v798 = vpop.xlane.xlu0 %797
          %v799 = vrot.slane %v798, 4
          %v800 = vadd.f32 %v798, %v799
          %v801 = vrot.slane %v800, 2
          %v802 = vadd.f32 %v800, %v801
          %v803 = vrot.slane %v802, 1
          %v804 = vadd.f32 %v802, %v803
          %s805 = vtos %v804
          %v806 = vadd.f32 %v783, 1.0
          %v807 = vmul.f32 %v774, %v774
          %v808 = vsub.f32 %v806, %v807
          %v809 = vmul.f32 %v789, %v789
          %v810 = vsub.f32 %v808, %v809
          %v811 = vsel %vm795, %v810, 0.0
          %812 = vadd.xlane.f32.xlu0 %v811
          %v813 = vpop.xlane.xlu0 %812
          %v814 = vrot.slane %v813, 4
          %v815 = vadd.f32 %v813, %v814
          %v816 = vrot.slane %v815, 2
          %v817 = vadd.f32 %v815, %v816
          %v818 = vrot.slane %v817, 1
          %v819 = vadd.f32 %v817, %v818
          %s820 = vtos %v819
          %s821 = sadd.f32 %s805, %s820
          %s822 = smul.f32 %s821, -0.5
          %s823 = smul.f32 %s822, 0.25
          %s824 = scalar_lea.smem [#allocation8], 0
          %825 = sst [smem:[%s824]] %s823
          %v826 = vld [vmem:[%s7] sm:$0xf]
          %v827 = vmul.f32 %v786, %v826
          %v828 = vadd.f32 %v625, %v827
          %v829 = vld [vmem:[%s8] sm:$0xf]
          %v830 = vmul.f32 %v789, %v829
          %v831 = vadd.f32 %v774, %v830
          %832 = vst [vmem:[#allocation3] sm:$0xf] %v828
          %833 = vst [vmem:[#allocation6] sm:$0xf] %v831
          %v834 = vpack.c.bf16 %v831, %v831
          %v835 = vld [vmem:[%s6] sm:$0xf]
          %v836 = vld [vmem:[%s6 + $0x4] sm:$0xf]
          %v837 = vld [vmem:[%s6 + $0x8] sm:$0xf]
          %v838 = vld [vmem:[%s6 + $0xc] sm:$0xf]
          %v839 = vld [vmem:[%s6 + $0x10] sm:$0xf]
          %v840 = vld [vmem:[%s6 + $0x14] sm:$0xf]
          %v841 = vld [vmem:[%s6 + $0x18] sm:$0xf]
          %v842 = vld [vmem:[%s6 + $0x1c] sm:$0xf]
          %v843 = vld [vmem:[%s6 + $0x20] sm:$0xf]
          %v844 = vld [vmem:[%s6 + $0x24] sm:$0xf]
          %v845 = vld [vmem:[%s6 + $0x28] sm:$0xf]
          %v846 = vld [vmem:[%s6 + $0x2c] sm:$0xf]
          %v847 = vld [vmem:[%s6 + $0x30] sm:$0xf]
          %v848 = vld [vmem:[%s6 + $0x34] sm:$0xf]
          %v849 = vld [vmem:[%s6 + $0x38] sm:$0xf]
          %v850 = vld [vmem:[%s6 + $0x3c] sm:$0xf]
          %v867 = vunpack.c.l.b16 %v835
          %v868 = vunpack.c.l.b16 %v836
          %v869 = vunpack.c.l.b16 %v837
          %v870 = vunpack.c.l.b16 %v838
          %v871 = vunpack.c.l.b16 %v839
          %v872 = vunpack.c.l.b16 %v840
          %v873 = vunpack.c.l.b16 %v841
          %v874 = vunpack.c.l.b16 %v842
          %v875 = vunpack.c.l.b16 %v843
          %v876 = vunpack.c.l.b16 %v844
          %v877 = vunpack.c.l.b16 %v845
          %v878 = vunpack.c.l.b16 %v846
          %v879 = vunpack.c.l.b16 %v847
          %v880 = vunpack.c.l.b16 %v848
          %v881 = vunpack.c.l.b16 %v849
          %v882 = vunpack.c.l.b16 %v850
          %v883 = vpack.c.b16 %v868, %v867
          %v884 = vpack.c.b16 %v870, %v869
          %v885 = vpack.c.b16 %v872, %v871
          %v886 = vpack.c.b16 %v874, %v873
          %v887 = vpack.c.b16 %v876, %v875
          %v888 = vpack.c.b16 %v878, %v877
          %v889 = vpack.c.b16 %v880, %v879
          %v890 = vpack.c.b16 %v882, %v881
          %899 = vmatprep.subr.bf16.mxu0 0
          %900 = vmatpush1.bf16.msra.mxu0 %v883
          %901 = vmatprep.subr.bf16.mxu0 0
          %902 = vmatpush1.bf16.msra.mxu0 %v884
          %903 = vmatprep.subr.bf16.mxu0 0
          %904 = vmatpush1.bf16.msra.mxu0 %v885
          %905 = vmatprep.subr.bf16.mxu0 0
          %906 = vmatpush1.bf16.msra.mxu0 %v886
          %907 = vmatprep.subr.bf16.mxu0 0
          %908 = vmatpush1.bf16.msra.mxu0 %v887
          %909 = vmatprep.subr.bf16.mxu0 0
          %910 = vmatpush1.bf16.msra.mxu0 %v888
          %911 = vmatprep.subr.bf16.mxu0 0
          %912 = vmatpush1.bf16.msra.mxu0 %v889
          %913 = vmatprep.subr.bf16.mxu0 0
          %914 = vmatpush1.bf16.msra.mxu0 %v890
          %915 = vmatprep.subr.bf16.mxu0 0
          %916 = vmatpush1.bf16.msra.mxu0 0
          %917 = vmatprep.subr.bf16.mxu0 0
          %918 = vmatpush1.bf16.msra.mxu0 0
          %919 = vmatprep.subr.bf16.mxu0 0
          %920 = vmatpush1.bf16.msra.mxu0 0
          %921 = vmatprep.subr.bf16.mxu0 0
          %922 = vmatpush1.bf16.msra.mxu0 0
          %923 = vmatprep.subr.bf16.mxu0 0
          %924 = vmatpush1.bf16.msra.mxu0 0
          %925 = vmatprep.subr.bf16.mxu0 0
          %926 = vmatpush1.bf16.msra.mxu0 0
          %927 = vmatprep.subr.bf16.mxu0 0
          %928 = vmatpush1.bf16.msra.mxu0 0
          %929 = vmatprep.subr.bf16.mxu0 0
          %930 = vmatpush1.bf16.msra.mxu0 0
          %931 = vmatprep.mubr.bf16.mxu0 0
          %932 = vmatmul.mubr.bf16.gmra.mrb[0].mxu0 %v834
          %v933 = vpop.f32.mrb[0].mxu0
          %v934 = vadd.f32 0.0, %v933
          %v935 = vpop.f32.mrb[0].mxu0
          %v936 = vpop.f32.mrb[0].mxu0
          %v937 = vpop.f32.mrb[0].mxu0
          %938 = vdwg.mxu0
          %v939 = vpack.c.bf16 %v934, %v934
          %940 = vst [vmem:[#allocation2] sm:$0x3] %v939
        $region68: #{jtnnvae_forward.1} parent=63 // pred_fallthru
          _
        %v941 = vld [vmem:[%s467] sm:$0xf]
        %v942 = vld [vmem:[%s467 + $0x4] sm:$0xf]
        %v943 = vld [vmem:[%s467 + $0x8] sm:$0xf]
        %v944 = vld [vmem:[%s467 + $0xc] sm:$0xf]
        %v945 = vld [vmem:[%s467 + $0x10] sm:$0xf]
        %v946 = vld [vmem:[%s467 + $0x14] sm:$0xf]
        %v947 = vld [vmem:[%s467 + $0x18] sm:$0xf]
        %v948 = vld [vmem:[%s467 + $0x1c] sm:$0xf]
        %v949 = vld [vmem:[%s467 + $0x20] sm:$0xf]
        %v950 = vld [vmem:[%s467 + $0x24] sm:$0xf]
        %v951 = vld [vmem:[%s467 + $0x28] sm:$0xf]
        %v952 = vld [vmem:[%s467 + $0x2c] sm:$0xf]
        %v953 = vld [vmem:[%s467 + $0x30] sm:$0xf]
        %v954 = vld [vmem:[%s467 + $0x34] sm:$0xf]
        %v955 = vld [vmem:[%s467 + $0x38] sm:$0xf]
        %v956 = vld [vmem:[%s467 + $0x3c] sm:$0xf]
        %v957 = vld [vmem:[#allocation2] sm:$0x3]
        %v974 = vunpack.c.l.b16 %v941
        %v975 = vunpack.c.l.b16 %v942
        %v976 = vunpack.c.l.b16 %v943
        %v977 = vunpack.c.l.b16 %v944
        %v978 = vunpack.c.l.b16 %v945
        %v979 = vunpack.c.l.b16 %v946
        %v980 = vunpack.c.l.b16 %v947
        %v981 = vunpack.c.l.b16 %v948
        %v982 = vunpack.c.l.b16 %v949
        %v983 = vunpack.c.l.b16 %v950
        %v984 = vunpack.c.l.b16 %v951
        %v985 = vunpack.c.l.b16 %v952
        %v986 = vunpack.c.l.b16 %v953
        %v987 = vunpack.c.l.b16 %v954
        %v988 = vunpack.c.l.b16 %v955
        %v989 = vunpack.c.l.b16 %v956
        %v990 = vpack.c.b16 %v975, %v974
        %v991 = vpack.c.b16 %v977, %v976
        %v992 = vpack.c.b16 %v979, %v978
        %v993 = vpack.c.b16 %v981, %v980
        %v994 = vpack.c.b16 %v983, %v982
        %v995 = vpack.c.b16 %v985, %v984
        %v996 = vpack.c.b16 %v987, %v986
        %v997 = vpack.c.b16 %v989, %v988
        %1006 = vmatprep.subr.bf16.mxu0 0
        %1007 = vmatpush1.bf16.xpose.msra.mxu0 %v990
        %1008 = vmatprep.subr.bf16.mxu0 0
        %1009 = vmatpush1.bf16.xpose.msra.mxu0 %v991
        %1010 = vmatprep.subr.bf16.mxu0 0
        %1011 = vmatpush1.bf16.xpose.msra.mxu0 %v992
        %1012 = vmatprep.subr.bf16.mxu0 0
        %1013 = vmatpush1.bf16.xpose.msra.mxu0 %v993
        %1014 = vmatprep.subr.bf16.mxu0 0
        %1015 = vmatpush1.bf16.xpose.msra.mxu0 %v994
        %1016 = vmatprep.subr.bf16.mxu0 0
        %1017 = vmatpush1.bf16.xpose.msra.mxu0 %v995
        %1018 = vmatprep.subr.bf16.mxu0 0
        %1019 = vmatpush1.bf16.xpose.msra.mxu0 %v996
        %1020 = vmatprep.subr.bf16.mxu0 0
        %1021 = vmatpush1.bf16.xpose.msra.mxu0 %v997
        %1022 = vmatprep.subr.bf16.mxu0 0
        %1023 = vmatpush1.bf16.xpose.msra.mxu0 0
        %1024 = vmatprep.subr.bf16.mxu0 0
        %1025 = vmatpush1.bf16.xpose.msra.mxu0 0
        %1026 = vmatprep.subr.bf16.mxu0 0
        %1027 = vmatpush1.bf16.xpose.msra.mxu0 0
        %1028 = vmatprep.subr.bf16.mxu0 0
        %1029 = vmatpush1.bf16.xpose.msra.mxu0 0
        %1030 = vmatprep.subr.bf16.mxu0 0
        %1031 = vmatpush1.bf16.xpose.msra.mxu0 0
        %1032 = vmatprep.subr.bf16.mxu0 0
        %1033 = vmatpush1.bf16.xpose.msra.mxu0 0
        %1034 = vmatprep.subr.bf16.mxu0 0
        %1035 = vmatpush1.bf16.xpose.msra.mxu0 0
        %1036 = vmatprep.subr.bf16.mxu0 0
        %1037 = vmatpush1.bf16.xpose.msra.mxu0 0
        %1038 = vmatprep.mubr.bf16.mxu0 0
        %1039 = vmatmul.mubr.bf16.gmra.mrb[0].mxu0 %v957
        %v1040 = vpop.f32.mrb[0].mxu0
        %v1041 = vadd.f32 0.0, %v1040
        %v1042 = vpop.f32.mrb[0].mxu0
        %v1043 = vpop.f32.mrb[0].mxu0
        %v1044 = vpop.f32.mrb[0].mxu0
        %1045 = vdwg.mxu0
        %v1046 = vld [vmem:[%s471] sm:$0x1]
        %v1047 = vlaneseq
        %v1048 = vshrl.u32 %v1047, 7
        %v1049 = vlaneseq
        %v1050 = vshrl.u32 %v1049, 7
        %v1051 = vsub.s32 0, %v1050
        %v1052 = vrot.slane %v1046, %v1051
        %vm1053 = vcmp.eq.s32.totalorder %v1052, %v1048
        %v1054 = vsel %vm1053, %v1041, 0.0
        %vm1055 = vcmask 1043456
        %v1056 = vsel %vm1055, %v1054, 0.0
        %v1057 = vrot.slane %v1056, 4
        %v1058 = vadd.f32 %v1056, %v1057
        %v1059 = vrot.slane %v1058, 2
        %v1060 = vadd.f32 %v1058, %v1059
        %v1061 = vrot.slane %v1060, 1
        %v1062 = vadd.f32 %v1060, %v1061
        %1063 = vst [vmem:[%s474] sm:$0x1] %v1062
        %p1064 = scmp.lt.s32.totalorder %s29, 2
        %s1065 = scalar_select %p1064, %s29, 2
        %s1066 = scalar_lea.vmem %s13, %s1065
        // Predicated region
        $region69: #{jtnnvae_forward.1} parent=63 // pred_check
          %p1067 = pneg %p283
        $region70: #{jtnnvae_forward.1} parent=63 // pred_check_branch
          %1069 = sbr.rel (%p1067) target = $region72
        $region71: #{jtnnvae_forward.1} parent=63 // pred_region
          %s1071 = ssub.s32 64, 64
          %1072 = vsyncadd [#allocation4], %s1071
          %s1074 = sshll.u32 [#allocation3], 4
          %s1075 = int_to_ptr.vmem [resolvable:$true] %s1074
          %1077 = dma.vmem_to_hbm [thread:$0]  %s1075, 64, %s11, [#allocation4]
        $region72: #{jtnnvae_forward.1} parent=63 // pred_fallthru
          _
        // Predicated region
        $region73: #{jtnnvae_forward.1} parent=63 // pred_check
          %p1078 = pneg %p304
        $region74: #{jtnnvae_forward.1} parent=63 // pred_check_branch
          %1080 = sbr.rel (%p1078) target = $region76
        $region75: #{jtnnvae_forward.1} parent=63 // pred_region
          %s1082 = ssub.s32 64, 64
          %1083 = vsyncadd [#allocation7], %s1082
          %s1085 = sshll.u32 [#allocation6], 4
          %s1086 = int_to_ptr.vmem [resolvable:$true] %s1085
          %1088 = dma.vmem_to_hbm [thread:$0]  %s1086, 64, %s12, [#allocation7]
        $region76: #{jtnnvae_forward.1} parent=63 // pred_fallthru
          _
        // Predicated region
        $region77: #{jtnnvae_forward.1} parent=63 // pred_check
          %p1089 = pneg %p330
        $region78: #{jtnnvae_forward.1} parent=63 // pred_check_branch
          %1091 = sbr.rel (%p1089) target = $region80
        $region79: #{jtnnvae_forward.1} parent=63 // pred_region
          _
        $region80: #{jtnnvae_forward.1} parent=63 // pred_fallthru
          _
        // Predicated region
        $region81: #{jtnnvae_forward.1} parent=63 // pred_check
          %p1092 = pneg %p351
        $region82: #{jtnnvae_forward.1} parent=63 // pred_check_branch
          %1094 = sbr.rel (%p1092) target = $region84
        $region83: #{jtnnvae_forward.1} parent=63 // pred_region
          %s1096 = ssub.s32 16, 16
          %1097 = vsyncadd [#allocation5], %s1096
          %1100 = dma.smem_to_hbm [#allocation8], 16, %s14, [#allocation5]
        $region84: #{jtnnvae_forward.1} parent=63 // pred_fallthru
          _
        // Predicated region
        $region85: #{jtnnvae_forward.1} parent=63 // pred_check
          %p1101 = pneg %p283
        $region86: #{jtnnvae_forward.1} parent=63 // pred_check_branch
          %1103 = sbr.rel (%p1101) target = $region88
        $region87: #{jtnnvae_forward.1} parent=63 // pred_region
          %1104 = dma.done [#allocation4], 64
        $region88: #{jtnnvae_forward.1} parent=63 // pred_fallthru
          _
        // Predicated region
        $region89: #{jtnnvae_forward.1} parent=63 // pred_check
          %p1105 = pneg %p304
        $region90: #{jtnnvae_forward.1} parent=63 // pred_check_branch
          %1107 = sbr.rel (%p1105) target = $region92
        $region91: #{jtnnvae_forward.1} parent=63 // pred_region
          %1108 = dma.done [#allocation7], 64
        $region92: #{jtnnvae_forward.1} parent=63 // pred_fallthru
          _
        // Predicated region
        $region93: #{jtnnvae_forward.1} parent=63 // pred_check
          %p1109 = pneg %p351
        $region94: #{jtnnvae_forward.1} parent=63 // pred_check_branch
          %1111 = sbr.rel (%p1109) target = $region96
        $region95: #{jtnnvae_forward.1} parent=63 // pred_region
          %1112 = dma.done [#allocation5], 16
        $region96: #{jtnnvae_forward.1} parent=63 // pred_fallthru
          _
        %1113 = sfence
      $region64: #{jtnnvae_forward.1} parent=5 // pred_fallthru
        _
      %p1114 = scmp.le.s32.totalorder 2, %s24
      // Predicated region
      $region97: #{jtnnvae_forward.1} parent=5 // pred_check
        %p1115 = pneg %p1114
      $region98: #{jtnnvae_forward.1} parent=5 // pred_check_branch
        %1117 = sbr.rel (%p1115) target = $region100
      $region99: #{jtnnvae_forward.1} parent=5 // pred_region
        %s1118 = ssub.s32 %s24, 2
        // Predicated region
        $region101: #{jtnnvae_forward.1} parent=99 // pred_check
          %p1119 = pneg %p336
        $region102: #{jtnnvae_forward.1} parent=99 // pred_check_branch
          %1121 = sbr.rel (%p1119) target = $region104
        $region103: #{jtnnvae_forward.1} parent=99 // pred_region
          %p1122 = scmp.lt.s32.totalorder %s30, 2
          %s1123 = scalar_select %p1122, %s30, 2
          %s1124 = scalar_lea.vmem %s13, %s1123
        $region104: #{jtnnvae_forward.1} parent=99 // pred_fallthru
          _
      $region100: #{jtnnvae_forward.1} parent=5 // pred_fallthru
        _
    $region6: #{jtnnvae_forward.1} parent=1 // loop_footer
      %s28 = sadd.s32 1, %s24
    $region7: #{jtnnvae_forward.1} parent=1 // loop_footer_branch
      %23 = sbr.rel target = $region3
    $region8: #{jtnnvae_forward.1} parent=1 // loop_exit
      _
    %1125 = vsyncpa [#allocation4], 1
    %s1126 = scalar_lea.sflag [#allocation4], 1
    %1127 = vsyncpa %s1126, 1
    %1128 = vsyncpa [#allocation7], 1
    %1129 = vsyncpa [#allocation5], 1
    %s1130 = scalar_lea.sflag [#allocation5], 1
    %1131 = vsyncpa %s1130, 1

</llo_original>
